<compile_context>
chip_gen: v7x
topology: tpu7x:2x2x1
jax: 0.10.0
libtpu: 0.0.40
codegen_flags: <defaults>
</compile_context>

<pallas_src>
import functools

import jax
import jax.numpy as jnp
import numpy as np
from jax.experimental import pallas as pl
from jax.experimental.pallas import tpu as pltpu

EPS = 1e-5
LANE = 128
SUBLANE_BF16 = 16


def _round_up(v, m):
    return (v + m - 1) // m * m


def _cdiv(a, b):
    return -(-a // b)


def _pick_tile_m(m, desired):
    """M tile: multiple of 16 (bf16 sublane pack); >=2 tiles when possible so
    the 'parallel' grid axis splits across v7x's two TensorCores; prefer an
    even tile count for load balance."""
    desired = max(SUBLANE_BF16, _round_up(desired, SUBLANE_BF16))
    tile = min(desired, max(SUBLANE_BF16, _round_up(_cdiv(m, 2), SUBLANE_BF16)))
    n_tiles = _cdiv(m, tile)
    if n_tiles > 1 and n_tiles % 2 == 1:
        tile = max(SUBLANE_BF16, _round_up(_cdiv(m, n_tiles + 1), SUBLANE_BF16))
        n_tiles = _cdiv(m, tile)
    return tile, n_tiles


def _vmem_limit_bytes(per_step_bytes):
    # Double-buffered pipeline + compiler scratch headroom, capped at v7x's
    # 64 MiB physical VMEM so the same sizing works on v5e/v6e/v7x.
    return int(min(max(2 * per_step_bytes + (4 << 20), 8 << 20), 64 << 20))


def _conv_relu_stats_kernel(patches_ref, w_ref, b_ref, y_ref, stats_ref, *,
                            tile_m, m_valid, n_tiles):
    """Pass 1 (one M-tile): conv-as-matmul + bias + ReLU, emit y + BN partials.

    patches_ref : (tile_m, K_pad)  bf16 im2col rows of this tile
    w_ref       : (K_pad, C_pad)   bf16 reshaped conv weight
    b_ref       : (1, C_pad)       f32  conv bias
    y_ref       : (tile_m, C_pad)  bf16 pre-BN activations (output)
    stats_ref   : (1, 2, C_pad)    f32  [sum, centered-sum-of-squares]
    """
    # bf16 x bf16 -> f32 accumulation: single-pass MXU matmul.
    y = jnp.dot(patches_ref[...], w_ref[...], preferred_element_type=jnp.float32)
    y = jnp.maximum(y + b_ref[...], 0.0)
    y_ref[...] = y.astype(y_ref.dtype)          # bf16 intermediate: half the HBM

    # BN partials come from the f32 `y` (before the bf16 store), so statistics
    # stay exact.  Centered (Chan-style) partials avoid E[y^2]-E[y]^2
    # cancellation when M grows large.
    def stats_full():
        s1 = jnp.sum(y, axis=0, keepdims=True)                       # (1, C)
        mu = s1 * (1.0 / float(tile_m))
        d = y - mu
        stats_ref[:, 0:1, :] = s1[None]
        stats_ref[:, 1:2, :] = jnp.sum(d * d, axis=0, keepdims=True)[None]

    last_valid = m_valid - (n_tiles - 1) * tile_m

    def stats_masked():
        # Only the last tile can contain padded rows; exclude them exactly.
        rows = jax.lax.broadcasted_iota(jnp.int32, (tile_m, 1), 0)
        valid = rows < last_valid
        y0 = jnp.where(valid, y, 0.0)
        s1 = jnp.sum(y0, axis=0, keepdims=True)
        mu = s1 * (1.0 / float(last_valid))
        d = jnp.where(valid, y - mu, 0.0)
        stats_ref[:, 0:1, :] = s1[None]
        stats_ref[:, 1:2, :] = jnp.sum(d * d, axis=0, keepdims=True)[None]

    if m_valid % tile_m == 0:
        stats_full()                      # no padded rows anywhere: no mask emitted
    else:
        not_last = pl.program_id(0) < n_tiles - 1
        pl.when(not_last)(stats_full)
        pl.when(jnp.logical_not(not_last))(stats_masked)


def _bn_apply_kernel(y_ref, scale_ref, shift_ref, out_ref):
    """Pass 2 (one M-tile): folded BatchNorm affine — one FMA per element."""
    y = y_ref[...].astype(jnp.float32)
    out_ref[...] = (y * scale_ref[...] + shift_ref[...]).astype(out_ref.dtype)


def d2block_forward(x, weight, bias, gamma, beta, *, stride, dilation, tile_m=1024):
    """x: (N, Cin, H, W) NCHW.  weight: (Cout, Cin, KH, KW) OIHW.  Returns NCHW."""
    N, Cin, H, W = x.shape
    Cout, _, KH, KW = weight.shape
    sh, sw = stride
    dh, dw = dilation
    Ho = (H - dh * (KH - 1) - 1) // sh + 1
    Wo = (W - dw * (KW - 1) - 1) // sw + 1

    M = N * Ho * Wo
    K = Cin * KH * KW
    # K only needs bf16 sublane packing, NOT lane (128) density: Mosaic pads
    # the contraction dim internally, so keep the HBM im2col stream narrow.
    K_pad = _round_up(K, SUBLANE_BF16)
    # Lane-pad channels only when Cout is already >= one lane; otherwise the
    # 128/Cout traffic inflation of y/out dwarfs the masked-store penalty.
    # (For v6e/v7x, real ECAPA configs with Cout >= 256 keep the 256-wide MXU full.)
    C_pad = _round_up(Cout, LANE) if Cout >= LANE else Cout

    tile_m, n_tiles = _pick_tile_m(M, tile_m)
    M_pad = n_tiles * tile_m

    # ---- glue: channel-last patch gather in bf16 (static slices only) ----
    x_nhwc = jnp.transpose(x, (0, 2, 3, 1)).astype(jnp.bfloat16)   # (N,H,W,Cin)
    cols = []
    for i in range(KH):
        for j in range(KW):
            cols.append(
                x_nhwc[:,
                       i * dh: i * dh + (Ho - 1) * sh + 1: sh,
                       j * dw: j * dw + (Wo - 1) * sw + 1: sw,
                       :])                                         # (N,Ho,Wo,Cin)
    patches = jnp.concatenate(cols, axis=-1).reshape(M, K)          # (M, K) bf16
    patches = jnp.pad(patches, ((0, M_pad - M), (0, K_pad - K)))

    # Weight with K ordered as (kh, kw, cin) to match the patch feature order.
    w_mat = jnp.transpose(weight, (2, 3, 1, 0)).reshape(K, Cout)
    w_mat = jnp.pad(w_mat, ((0, K_pad - K), (0, C_pad - Cout))).astype(jnp.bfloat16)
    b_pad = jnp.pad(bias, (0, C_pad - Cout)).reshape(1, C_pad).astype(jnp.float32)
    gamma_p = jnp.pad(gamma, (0, C_pad - Cout)).astype(jnp.float32)
    beta_p = jnp.pad(beta, (0, C_pad - Cout)).astype(jnp.float32)

    # ---------------- pass 1: conv + bias + ReLU + BN partial sums --------
    p1_step_bytes = (tile_m * K_pad * 2 + K_pad * C_pad * 2 + C_pad * 4
                     + tile_m * C_pad * 2 + 2 * C_pad * 4)
    p1_flops = 2 * M_pad * K_pad * C_pad
    p1_bytes = (M_pad * K_pad * 2 + K_pad * C_pad * 2 + C_pad * 4
                + M_pad * C_pad * 2 + n_tiles * 2 * C_pad * 4)
    kernel1 = functools.partial(_conv_relu_stats_kernel,
                                tile_m=tile_m, m_valid=M, n_tiles=n_tiles)
    y_flat, stats = pl.pallas_call(
        kernel1,
        out_shape=(jax.ShapeDtypeStruct((M_pad, C_pad), jnp.bfloat16),
                   jax.ShapeDtypeStruct((n_tiles, 2, C_pad), jnp.float32)),
        grid=(n_tiles,),
        in_specs=[
            pl.BlockSpec((tile_m, K_pad), lambda i: (i, 0)),
            pl.BlockSpec((K_pad, C_pad), lambda i: (0, 0)),
            pl.BlockSpec((1, C_pad), lambda i: (0, 0)),
        ],
        out_specs=(
            pl.BlockSpec((tile_m, C_pad), lambda i: (i, 0)),
            pl.BlockSpec((1, 2, C_pad), lambda i: (i, 0, 0)),
        ),
        compiler_params=pltpu.CompilerParams(
            dimension_semantics=("parallel",),
            vmem_limit_bytes=_vmem_limit_bytes(p1_step_bytes)),
        cost_estimate=pl.CostEstimate(flops=p1_flops, transcendentals=0,
                                      bytes_accessed=p1_bytes),
    )(patches, w_mat, b_pad)

    # ---- tiny XLA glue: fold BN (training mode, biased var) into scale/shift
    # Chan-style combine of per-tile (count, sum, centered-SS) partials.
    counts_np = np.full((n_tiles, 1), float(tile_m), dtype=np.float32)
    counts_np[-1, 0] = float(M - (n_tiles - 1) * tile_m)
    counts = jnp.asarray(counts_np)                              # (n_tiles, 1)
    sums = stats[:, 0, :]                                        # (n_tiles, C_pad)
    css = stats[:, 1, :]                                         # centered SS
    mean = jnp.sum(sums, axis=0) / M
    mu_t = sums / counts
    var = (jnp.sum(css, axis=0)
           + jnp.sum(counts * (mu_t - mean[None, :]) ** 2, axis=0)) / M
    var = jnp.maximum(var, 0.0)                                  # biased variance
    scale = gamma_p * jax.lax.rsqrt(var + EPS)
    shift = beta_p - mean * scale

    # ---------------- pass 2: normalize sweep (one FMA per element) -------
    out_itemsize = jnp.dtype(x.dtype).itemsize
    p2_step_bytes = tile_m * C_pad * 2 + 2 * C_pad * 4 + tile_m * C_pad * out_itemsize
    p2_bytes = M_pad * C_pad * 2 + 2 * C_pad * 4 + M_pad * C_pad * out_itemsize
    out_flat = pl.pallas_call(
        _bn_apply_kernel,
        out_shape=jax.ShapeDtypeStruct((M_pad, C_pad), x.dtype),
        grid=(n_tiles,),
        in_specs=[
            pl.BlockSpec((tile_m, C_pad), lambda i: (i, 0)),
            pl.BlockSpec((1, C_pad), lambda i: (0, 0)),
            pl.BlockSpec((1, C_pad), lambda i: (0, 0)),
        ],
        out_specs=pl.BlockSpec((tile_m, C_pad), lambda i: (i, 0)),
        compiler_params=pltpu.CompilerParams(
            dimension_semantics=("parallel",),
            vmem_limit_bytes=_vmem_limit_bytes(p2_step_bytes)),
        cost_estimate=pl.CostEstimate(flops=2 * M_pad * C_pad, transcendentals=0,
                                      bytes_accessed=p2_bytes),
    )(y_flat, scale.reshape(1, C_pad), shift.reshape(1, C_pad))

    out = out_flat[:M, :Cout].reshape(N, Ho, Wo, Cout)
    # PyTorch module contract is NCHW; a channel-last consumer could skip this.
    return jnp.transpose(out, (0, 3, 1, 2))


def _reference(x, weight, bias, gamma, beta, *, stride, dilation):
    """Pure-JAX f32 reference: lax conv + ReLU + training-mode BN."""
    y = jax.lax.conv_general_dilated(
        x, weight, window_strides=stride, padding="VALID",
        rhs_dilation=dilation, dimension_numbers=("NCHW", "OIHW", "NCHW"),
        precision=jax.lax.Precision.HIGHEST)
    y = y + bias[None, :, None, None]
    y = jnp.maximum(y, 0.0)
    mean = jnp.mean(y, axis=(0, 2, 3), keepdims=True)
    var = jnp.mean((y - mean) ** 2, axis=(0, 2, 3), keepdims=True)
    y_hat = (y - mean) * jax.lax.rsqrt(var + EPS)
    return y_hat * gamma[None, :, None, None] + beta[None, :, None, None]


if __name__ == "__main__":
    # Small, module-consistent shapes.
    N, Cin, H, W = 2, 4, 16, 16
    Cout, KH, KW = 8, 3, 3
    stride = (1, 1)
    dilation = (1, 1)

    key = jax.random.PRNGKey(0)
    kx, kw, kb = jax.random.split(key, 3)
    x = jax.random.normal(kx, (N, Cin, H, W), dtype=jnp.float32)
    weight = 0.1 * jax.random.normal(kw, (Cout, Cin, KH, KW), dtype=jnp.float32)
    bias = 0.05 * jax.random.normal(kb, (Cout,), dtype=jnp.float32)
    gamma = jnp.ones((Cout,), dtype=jnp.float32)   # BatchNorm2d default weight
    beta = jnp.zeros((Cout,), dtype=jnp.float32)   # BatchNorm2d default bias

    # The tile picker caps tile_m so the demo still runs a 2-tile "parallel"
    # grid (exercising the masked-last-tile stats path).
    fwd = jax.jit(functools.partial(d2block_forward, stride=stride,
                                    dilation=dilation))
    out = jax.block_until_ready(fwd(x, weight, bias, gamma, beta))

    ref = _reference(x, weight, bias, gamma, beta, stride=stride, dilation=dilation)
    # Tolerance sized for the bf16 MXU operands + bf16 pre-BN intermediate
    # (stats themselves are accumulated in f32).
    np.testing.assert_allclose(np.asarray(out), np.asarray(ref), rtol=5e-2, atol=6e-2)

    print("KERNEL_OK")
</pallas_src>

<mosaic_0001>
module attributes {stable_mosaic.version = 11 : i64} {
  func.func @_conv_relu_stats_kernel(%arg0: i32, %arg1: memref<208x48xbf16, #tpu.memory_space<vmem>>, %arg2: memref<48x8xbf16, #tpu.memory_space<vmem>>, %arg3: memref<1x8xf32, #tpu.memory_space<vmem>>, %arg4: memref<208x8xbf16, #tpu.memory_space<vmem>>, %arg5: memref<1x2x8xf32, #tpu.memory_space<vmem>>) attributes {dimension_semantics = [#tpu.dimension_semantics<parallel>], iteration_bounds = array<i64: 2>, scalar_prefetch = 0 : i64, scratch_operands = 0 : i64, tpu.core_type = #tpu.core_type<tc>, window_params = [{transform_indices = @transform_0, window_bounds = array<i64: 208, 48>}, {pipeline_mode = #tpu.pipeline_mode<synchronous>, transform_indices = @transform_1, window_bounds = array<i64: 48, 8>}, {pipeline_mode = #tpu.pipeline_mode<synchronous>, transform_indices = @transform_2, window_bounds = array<i64: 1, 8>}, {transform_indices = @transform_3, window_bounds = array<i64: 208, 8>}, {transform_indices = @transform_4, window_bounds = array<i64: 1, 2, 8>}]} {
    %c0 = arith.constant 0 : index
    %c0_0 = arith.constant 0 : index
    %0 = vector.load %arg1[%c0, %c0_0] : memref<208x48xbf16, #tpu.memory_space<vmem>>, vector<208x48xbf16>
    %c0_1 = arith.constant 0 : index
    %c0_2 = arith.constant 0 : index
    %1 = vector.load %arg2[%c0_1, %c0_2] : memref<48x8xbf16, #tpu.memory_space<vmem>>, vector<48x8xbf16>
    %cst = arith.constant dense<0.000000e+00> : vector<208x8xf32>
    %2 = tpu.matmul %0, %1, %cst {dimension_numbers = #tpu.dot_dimension_numbers<[1], [0], [0], [1], [0, 0, 1, 1], [], []>} : vector<208x48xbf16>, vector<48x8xbf16>, vector<208x8xf32> -> vector<208x8xf32>
    %c0_3 = arith.constant 0 : index
    %c0_4 = arith.constant 0 : index
    %3 = vector.load %arg3[%c0_3, %c0_4] : memref<1x8xf32, #tpu.memory_space<vmem>>, vector<1x8xf32>
    %4 = vector.broadcast %3 : vector<1x8xf32> to vector<208x8xf32>
    %5 = arith.addf %2, %4 : vector<208x8xf32>
    %cst_5 = arith.constant 0.000000e+00 : f32
    %6 = vector.broadcast %cst_5 : f32 to vector<208x8xf32>
    %7 = arith.maximumf %5, %6 : vector<208x8xf32>
    %8 = arith.truncf %7 : vector<208x8xf32> to vector<208x8xbf16>
    %c0_6 = arith.constant 0 : index
    %c0_7 = arith.constant 0 : index
    %9 = vector.load %arg4[%c0_6, %c0_7] : memref<208x8xbf16, #tpu.memory_space<vmem>>, vector<208x8xbf16>
    tpu.vector_store %arg4[%c0_6, %c0_7], %8 {strides = array<i32>} : memref<208x8xbf16, #tpu.memory_space<vmem>>, vector<208x8xbf16>,
    %c1_i32 = arith.constant 1 : i32
    %10 = arith.cmpi slt, %arg0, %c1_i32 : i32
    %11 = arith.extui %10 : i1 to i32
    %c0_i32 = arith.constant 0 : i32
    %12 = arith.cmpi ne, %11, %c0_i32 : i32
    scf.if %12 {
      %cst_9 = arith.constant dense<0.000000e+00> : vector<8xf32>
      %16 = vector.multi_reduction <add>, %7, %cst_9 [0] : vector<208x8xf32> to vector<8xf32>
      %17 = vector.shape_cast %16 : vector<8xf32> to vector<1x8xf32>
      %cst_10 = arith.constant 0.00480769249 : f32
      %18 = vector.broadcast %cst_10 : f32 to vector<1x8xf32>
      %19 = arith.mulf %17, %18 : vector<1x8xf32>
      %20 = vector.broadcast %19 : vector<1x8xf32> to vector<208x8xf32>
      %21 = arith.subf %7, %20 : vector<208x8xf32>
      %22 = vector.shape_cast %17 : vector<1x8xf32> to vector<1x1x8xf32>
      %c0_11 = arith.constant 0 : index
      %c0_12 = arith.constant 0 : index
      %c0_13 = arith.constant 0 : index
      %23 = vector.load %arg5[%c0_11, %c0_12, %c0_13] : memref<1x2x8xf32, #tpu.memory_space<vmem>>, vector<1x1x8xf32>
      tpu.vector_store %arg5[%c0_11, %c0_12, %c0_13], %22 {strides = array<i32>} : memref<1x2x8xf32, #tpu.memory_space<vmem>>, vector<1x1x8xf32>,
      %24 = arith.mulf %21, %21 : vector<208x8xf32>
      %cst_14 = arith.constant dense<0.000000e+00> : vector<8xf32>
      %25 = vector.multi_reduction <add>, %24, %cst_14 [0] : vector<208x8xf32> to vector<8xf32>
      %26 = vector.shape_cast %25 : vector<8xf32> to vector<1x8xf32>
      %27 = vector.shape_cast %26 : vector<1x8xf32> to vector<1x1x8xf32>
      %c0_15 = arith.constant 0 : index
      %c1 = arith.constant 1 : index
      %c0_16 = arith.constant 0 : index
      %28 = vector.load %arg5[%c0_15, %c1, %c0_16] : memref<1x2x8xf32, #tpu.memory_space<vmem>>, vector<1x1x8xf32>
      tpu.vector_store %arg5[%c0_15, %c1, %c0_16], %27 {strides = array<i32>} : memref<1x2x8xf32, #tpu.memory_space<vmem>>, vector<1x1x8xf32>,
    } else {
    }
    %true = arith.constant true
    %13 = arith.xori %10, %true : i1
    %14 = arith.extui %13 : i1 to i32
    %c0_i32_8 = arith.constant 0 : i32
    %15 = arith.cmpi ne, %14, %c0_i32_8 : i32
    scf.if %15 {
      %16 = tpu.iota {dimensions = array<i32: 0>} : vector<208x1xi32>
      %c184_i32 = arith.constant 184 : i32
      %17 = vector.broadcast %c184_i32 : i32 to vector<208x1xi32>
      %18 = arith.cmpi slt, %16, %17 : vector<208x1xi32>
      %cst_9 = arith.constant 0.000000e+00 : f32
      %19 = vector.shape_cast %18 : vector<208x1xi1> to vector<208x1xi1>
      %20 = vector.broadcast %19 : vector<208x1xi1> to vector<208x8xi1>
      %21 = vector.broadcast %cst_9 : f32 to vector<208x8xf32>
      %22 = arith.select %20, %7, %21 : vector<208x8xi1>, vector<208x8xf32>
      %cst_10 = arith.constant dense<0.000000e+00> : vector<8xf32>
      %23 = vector.multi_reduction <add>, %22, %cst_10 [0] : vector<208x8xf32> to vector<8xf32>
      %24 = vector.shape_cast %23 : vector<8xf32> to vector<1x8xf32>
      %cst_11 = arith.constant 0.00543478271 : f32
      %25 = vector.broadcast %cst_11 : f32 to vector<1x8xf32>
      %26 = arith.mulf %24, %25 : vector<1x8xf32>
      %27 = vector.broadcast %26 : vector<1x8xf32> to vector<208x8xf32>
      %28 = arith.subf %7, %27 : vector<208x8xf32>
      %cst_12 = arith.constant 0.000000e+00 : f32
      %29 = vector.shape_cast %18 : vector<208x1xi1> to vector<208x1xi1>
      %30 = vector.broadcast %29 : vector<208x1xi1> to vector<208x8xi1>
      %31 = vector.broadcast %cst_12 : f32 to vector<208x8xf32>
      %32 = arith.select %30, %28, %31 : vector<208x8xi1>, vector<208x8xf32>
      %33 = vector.shape_cast %24 : vector<1x8xf32> to vector<1x1x8xf32>
      %c0_13 = arith.constant 0 : index
      %c0_14 = arith.constant 0 : index
      %c0_15 = arith.constant 0 : index
      %34 = vector.load %arg5[%c0_13, %c0_14, %c0_15] : memref<1x2x8xf32, #tpu.memory_space<vmem>>, vector<1x1x8xf32>
      tpu.vector_store %arg5[%c0_13, %c0_14, %c0_15], %33 {strides = array<i32>} : memref<1x2x8xf32, #tpu.memory_space<vmem>>, vector<1x1x8xf32>,
      %35 = arith.mulf %32, %32 : vector<208x8xf32>
      %cst_16 = arith.constant dense<0.000000e+00> : vector<8xf32>
      %36 = vector.multi_reduction <add>, %35, %cst_16 [0] : vector<208x8xf32> to vector<8xf32>
      %37 = vector.shape_cast %36 : vector<8xf32> to vector<1x8xf32>
      %38 = vector.shape_cast %37 : vector<1x8xf32> to vector<1x1x8xf32>
      %c0_17 = arith.constant 0 : index
      %c1 = arith.constant 1 : index
      %c0_18 = arith.constant 0 : index
      %39 = vector.load %arg5[%c0_17, %c1, %c0_18] : memref<1x2x8xf32, #tpu.memory_space<vmem>>, vector<1x1x8xf32>
      tpu.vector_store %arg5[%c0_17, %c1, %c0_18], %38 {strides = array<i32>} : memref<1x2x8xf32, #tpu.memory_space<vmem>>, vector<1x1x8xf32>,
    } else {
    }
    return
  }
  func.func @transform_0(%arg0: i32) -> (i32, i32) {
    %c0_i32 = arith.constant 0 : i32
    %c0_i32_0 = arith.constant 0 : i32
    return %arg0, %c0_i32 : i32, i32
  }
  func.func @transform_1(%arg0: i32) -> (i32, i32) {
    %c0_i32 = arith.constant 0 : i32
    %c0_i32_0 = arith.constant 0 : i32
    %c0_i32_1 = arith.constant 0 : i32
    return %c0_i32, %c0_i32_0 : i32, i32
  }
  func.func @transform_2(%arg0: i32) -> (i32, i32) {
    %c0_i32 = arith.constant 0 : i32
    %c0_i32_0 = arith.constant 0 : i32
    %c0_i32_1 = arith.constant 0 : i32
    return %c0_i32, %c0_i32_0 : i32, i32
  }
  func.func @transform_3(%arg0: i32) -> (i32, i32) {
    %c0_i32 = arith.constant 0 : i32
    %c0_i32_0 = arith.constant 0 : i32
    return %arg0, %c0_i32 : i32, i32
  }
  func.func @transform_4(%arg0: i32) -> (i32, i32, i32) {
    %c0_i32 = arith.constant 0 : i32
    %c0_i32_0 = arith.constant 0 : i32
    %c0_i32_1 = arith.constant 0 : i32
    return %arg0, %c0_i32, %c0_i32_0 : i32, i32, i32
  }
}

module attributes {stable_mosaic.version = 11 : i64} {
  func.func @_bn_apply_kernel(%arg0: i32, %arg1: memref<208x8xbf16, #tpu.memory_space<vmem>>, %arg2: memref<1x8xf32, #tpu.memory_space<vmem>>, %arg3: memref<1x8xf32, #tpu.memory_space<vmem>>, %arg4: memref<208x8xf32, #tpu.memory_space<vmem>>) attributes {dimension_semantics = [#tpu.dimension_semantics<parallel>], iteration_bounds = array<i64: 2>, scalar_prefetch = 0 : i64, scratch_operands = 0 : i64, tpu.core_type = #tpu.core_type<tc>, window_params = [{transform_indices = @transform_0, window_bounds = array<i64: 208, 8>}, {pipeline_mode = #tpu.pipeline_mode<synchronous>, transform_indices = @transform_1, window_bounds = array<i64: 1, 8>}, {pipeline_mode = #tpu.pipeline_mode<synchronous>, transform_indices = @transform_2, window_bounds = array<i64: 1, 8>}, {transform_indices = @transform_3, window_bounds = array<i64: 208, 8>}]} {
    %c0 = arith.constant 0 : index
    %c0_0 = arith.constant 0 : index
    %0 = vector.load %arg1[%c0, %c0_0] : memref<208x8xbf16, #tpu.memory_space<vmem>>, vector<208x8xbf16>
    %1 = arith.extf %0 : vector<208x8xbf16> to vector<208x8xf32>
    %c0_1 = arith.constant 0 : index
    %c0_2 = arith.constant 0 : index
    %2 = vector.load %arg2[%c0_1, %c0_2] : memref<1x8xf32, #tpu.memory_space<vmem>>, vector<1x8xf32>
    %3 = vector.broadcast %2 : vector<1x8xf32> to vector<208x8xf32>
    %4 = arith.mulf %1, %3 : vector<208x8xf32>
    %c0_3 = arith.constant 0 : index
    %c0_4 = arith.constant 0 : index
    %5 = vector.load %arg3[%c0_3, %c0_4] : memref<1x8xf32, #tpu.memory_space<vmem>>, vector<1x8xf32>
    %6 = vector.broadcast %5 : vector<1x8xf32> to vector<208x8xf32>
    %7 = arith.addf %4, %6 : vector<208x8xf32>
    %c0_5 = arith.constant 0 : index
    %c0_6 = arith.constant 0 : index
    %8 = vector.load %arg4[%c0_5, %c0_6] : memref<208x8xf32, #tpu.memory_space<vmem>>, vector<208x8xf32>
    tpu.vector_store %arg4[%c0_5, %c0_6], %7 {strides = array<i32>} : memref<208x8xf32, #tpu.memory_space<vmem>>, vector<208x8xf32>,
    return
  }
  func.func @transform_0(%arg0: i32) -> (i32, i32) {
    %c0_i32 = arith.constant 0 : i32
    %c0_i32_0 = arith.constant 0 : i32
    return %arg0, %c0_i32 : i32, i32
  }
  func.func @transform_1(%arg0: i32) -> (i32, i32) {
    %c0_i32 = arith.constant 0 : i32
    %c0_i32_0 = arith.constant 0 : i32
    %c0_i32_1 = arith.constant 0 : i32
    return %c0_i32, %c0_i32_0 : i32, i32
  }
  func.func @transform_2(%arg0: i32) -> (i32, i32) {
    %c0_i32 = arith.constant 0 : i32
    %c0_i32_0 = arith.constant 0 : i32
    %c0_i32_1 = arith.constant 0 : i32
    return %c0_i32, %c0_i32_0 : i32, i32
  }
  func.func @transform_3(%arg0: i32) -> (i32, i32) {
    %c0_i32 = arith.constant 0 : i32
    %c0_i32_0 = arith.constant 0 : i32
    return %arg0, %c0_i32 : i32, i32
  }
}

</mosaic_0001>

<llo_original>
// kernel: d2block_forward.3
$region0: #{d2block_forward.3}
  #allocation0 [shape = 'u32[]', space=smem, size = 0x4, offset = 0x4, fixed_abs, tag = 'smem constant byte address 0x4 - core index']
  #allocation1 [shape = 'u32[144,128]{1,0:T(1,128)}', space=vmem, size = 0x12000, scoped, tag = 'internal scratch']
  %s0 = inlined_call_operand.vmem [shape: bf16[416,8], index: 0, kind: input, shape index: {}]
  %s1 = inlined_call_operand.vmem [shape: f32[1,8], index: 1, kind: input, shape index: {}]
  %s2 = inlined_call_operand.vmem [shape: f32[1,8], index: 2, kind: input, shape index: {}]
  %s3 = inlined_call_operand.vmem [shape: f32[416,8], index: 3, kind: output, shape index: {}]
  %s4 = sld [smem:[#allocation0]]
  $region45: #{d2block_forward.3} parent=0
    _
  %s6 = ssub.s32 1, %s4
  %s7 = scalar_select 0, %s6, %s4
  loop: start=0, step=1, limit=4
  $region2: #{d2block_forward.3} parent=0 // loop_pre_header
    _
  $region3: #{d2block_forward.3} parent=0 // loop_header
    %s9 = sphi 0, %s13
    %p10 = scmp.ge.s32.totalorder %s9, 4
    %s19 = sphi 0, %s21
    %s22 = sphi 0, %s19
    %s23 = sphi 0, %s22
    %s39 = sphi 0, %s23
    %s43 = sphi 0, %s43
    %s45 = sphi 0, %s43
    %s46 = sphi 0, %s45
    %s60 = sphi 0, %s46
    %s64 = sphi 0, %s64
    %s66 = sphi 0, %s64
    %s67 = sphi 0, %s66
    %s81 = sphi 0, %s67
    %s87 = sphi 0, %s89
    %s90 = sphi 0, %s87
    %s91 = sphi 0, %s90
    %s107 = sphi 0, %s91
  $region4: #{d2block_forward.3} parent=0 // loop_header_branch
    %12 = sbr.rel (%p10) target = $region8
  $region5: #{d2block_forward.3} parent=0 // loop_body
    %s14 = ssub.s32 %s9, 1
    %s15 = ssub.s32 %s9, 2
    %s16 = sadd.s32 %s9, 1
    %s17 = ssub.s32 %s9, %s16
    %p18 = scmp.eq.s32.totalorder %s17, 0
    %s20 = sadd.s32 %s19, 1
    %s21 = scalar_select %p18, %s19, %s20
    %p24 = pneg %p18
    %p25 = scmp.eq.s32.totalorder %s9, 1
    %p26 = por %p24, %p25
    %p27 = scmp.ne.s32.totalorder %s19, %s22
    %p28 = scmp.eq.s32.totalorder %s9, 0
    %p29 = por %p27, %p28
    %p30 = scmp.ne.s32.totalorder %s19, %s22
    %p31 = scmp.eq.s32.totalorder %s14, 1
    %p32 = por %p30, %p31
    %p33 = scmp.ne.s32.totalorder %s22, %s23
    %p34 = scmp.eq.s32.totalorder %s14, 0
    %p35 = por %p33, %p34
    %p36 = scmp.ne.s32.totalorder %s22, %s23
    %p37 = scmp.eq.s32.totalorder %s15, 1
    %p38 = por %p36, %p37
    %p40 = scmp.ne.s32.totalorder %s23, %s39
    %p41 = scmp.eq.s32.totalorder %s15, 0
    %p42 = por %p40, %p41
    %s44 = sadd.s32 %s43, 1
    %p47 = scmp.eq.s32.totalorder %s9, 1
    %p48 = scmp.ne.s32.totalorder %s43, %s45
    %p49 = scmp.eq.s32.totalorder %s9, 0
    %p50 = por %p48, %p49
    %p51 = scmp.ne.s32.totalorder %s43, %s45
    %p52 = scmp.eq.s32.totalorder %s14, 1
    %p53 = por %p51, %p52
    %p54 = scmp.ne.s32.totalorder %s45, %s46
    %p55 = scmp.eq.s32.totalorder %s14, 0
    %p56 = por %p54, %p55
    %p57 = scmp.ne.s32.totalorder %s45, %s46
    %p58 = scmp.eq.s32.totalorder %s15, 1
    %p59 = por %p57, %p58
    %p61 = scmp.ne.s32.totalorder %s46, %s60
    %p62 = scmp.eq.s32.totalorder %s15, 0
    %p63 = por %p61, %p62
    %s65 = sadd.s32 %s64, 1
    %p68 = scmp.eq.s32.totalorder %s9, 1
    %p69 = scmp.ne.s32.totalorder %s64, %s66
    %p70 = scmp.eq.s32.totalorder %s9, 0
    %p71 = por %p69, %p70
    %p72 = scmp.ne.s32.totalorder %s64, %s66
    %p73 = scmp.eq.s32.totalorder %s14, 1
    %p74 = por %p72, %p73
    %p75 = scmp.ne.s32.totalorder %s66, %s67
    %p76 = scmp.eq.s32.totalorder %s14, 0
    %p77 = por %p75, %p76
    %p78 = scmp.ne.s32.totalorder %s66, %s67
    %p79 = scmp.eq.s32.totalorder %s15, 1
    %p80 = por %p78, %p79
    %p82 = scmp.ne.s32.totalorder %s67, %s81
    %p83 = scmp.eq.s32.totalorder %s15, 0
    %p84 = por %p82, %p83
    %s85 = ssub.s32 %s9, %s16
    %p86 = scmp.eq.s32.totalorder %s85, 0
    %s88 = sadd.s32 %s87, 1
    %s89 = scalar_select %p86, %s87, %s88
    %p92 = pneg %p86
    %p93 = scmp.eq.s32.totalorder %s9, 1
    %p94 = por %p92, %p93
    %p95 = scmp.ne.s32.totalorder %s87, %s90
    %p96 = scmp.eq.s32.totalorder %s9, 0
    %p97 = por %p95, %p96
    %p98 = scmp.ne.s32.totalorder %s87, %s90
    %p99 = scmp.eq.s32.totalorder %s14, 1
    %p100 = por %p98, %p99
    %p101 = scmp.ne.s32.totalorder %s90, %s91
    %p102 = scmp.eq.s32.totalorder %s14, 0
    %p103 = por %p101, %p102
    %p104 = scmp.ne.s32.totalorder %s90, %s91
    %p105 = scmp.eq.s32.totalorder %s15, 1
    %p106 = por %p104, %p105
    %p108 = scmp.ne.s32.totalorder %s91, %s107
    %p109 = scmp.eq.s32.totalorder %s15, 0
    %p110 = por %p108, %p109
    %p111 = scmp.le.s32.totalorder 1, %s9
    %p112 = scmp.lt.s32.totalorder %s9, 3
    %p113 = pnand %p111, %p112
    %p114 = pneg %p113
    // Predicated region
    $region9: #{d2block_forward.3} parent=5 // pred_check
      _
    $region10: #{d2block_forward.3} parent=5 // pred_check_branch
      %116 = sbr.rel (%p113) target = $region12
    $region11: #{d2block_forward.3} parent=5 // pred_region
      %s117 = ssub.s32 %s9, 1
      // Predicated region
      $region13: #{d2block_forward.3} parent=11 // pred_check
        %p118 = pneg %p56
      $region14: #{d2block_forward.3} parent=11 // pred_check_branch
        %120 = sbr.rel (%p118) target = $region16
      $region15: #{d2block_forward.3} parent=11 // pred_region
        _
      $region16: #{d2block_forward.3} parent=11 // pred_fallthru
        _
      // Predicated region
      $region17: #{d2block_forward.3} parent=11 // pred_check
        %p121 = pneg %p77
      $region18: #{d2block_forward.3} parent=11 // pred_check_branch
        %123 = sbr.rel (%p121) target = $region20
      $region19: #{d2block_forward.3} parent=11 // pred_region
        _
      $region20: #{d2block_forward.3} parent=11 // pred_fallthru
        _
    $region12: #{d2block_forward.3} parent=5 // pred_fallthru
      _
    %p124 = scmp.lt.s32.totalorder %s9, 2
    // Predicated region
    $region21: #{d2block_forward.3} parent=5 // pred_check
      %p125 = pneg %p124
    $region22: #{d2block_forward.3} parent=5 // pred_check_branch
      %127 = sbr.rel (%p125) target = $region24
    $region23: #{d2block_forward.3} parent=5 // pred_region
      // Predicated region
      $region25: #{d2block_forward.3} parent=23 // pred_check
        %p128 = pneg %p29
      $region26: #{d2block_forward.3} parent=23 // pred_check_branch
        %130 = sbr.rel (%p128) target = $region28
      $region27: #{d2block_forward.3} parent=23 // pred_region
        %s131 = smul.u32 26, %s9
        %p132 = scmp.lt.s32.totalorder %s131, 51
        %s133 = scalar_select %p132, %s131, 51
        %s134 = smul.addr %s133, 4
        %s135 = scalar_lea.vmem %s0, %s134
        %s136 = smul.u32 26, %s9
      $region28: #{d2block_forward.3} parent=23 // pred_fallthru
        _
    $region24: #{d2block_forward.3} parent=5 // pred_fallthru
      _
    %p137 = scmp.le.s32.totalorder 1, %s9
    %p138 = scmp.lt.s32.totalorder %s9, 3
    %p139 = pnand %p137, %p138
    %p140 = pneg %p139
    // Predicated region
    $region29: #{d2block_forward.3} parent=5 // pred_check
      _
    $region30: #{d2block_forward.3} parent=5 // pred_check_branch
      %142 = sbr.rel (%p139) target = $region32
    $region31: #{d2block_forward.3} parent=5 // pred_region
      %s143 = ssub.s32 %s9, 1
      %s144 = smul.u32 26, %s14
      %p145 = scmp.lt.s32.totalorder %s144, 51
      %s146 = scalar_select %p145, %s144, 51
      %s147 = smul.addr %s146, 4
      %s148 = scalar_lea.vmem %s0, %s147
      %p149 = pneg %p35
      %p150 = pneg %p32
      %p151 = pneg %p56
      %p152 = pneg %p53
      %p153 = pneg %p77
      %p154 = pneg %p74
      %p155 = pneg %p103
      %p156 = pneg %p100
      %s157 = smul.u32 26, %s14
      %p158 = scmp.lt.s32.totalorder %s157, 51
      %s159 = scalar_select %p158, %s157, 51
      %s160 = smul.addr %s159, 8
      %s161 = scalar_lea.vmem %s3, %s160
      %s162 = smul.u32 26, %s14
      %p163 = scmp.lt.s32.totalorder %s162, 51
      %s164 = scalar_select %p163, %s162, 51
      %s165 = smul.addr %s164, 4
      %s166 = scalar_lea.vmem %s0, %s165
      %s167 = smul.u32 26, %s14
      %s168 = smul.u32 26, %s14
      %p169 = scmp.lt.s32.totalorder %s168, 51
      %s170 = scalar_select %p169, %s168, 51
      %s171 = smul.addr %s170, 8
      %s172 = scalar_lea.vmem %s3, %s171
      %s173 = smul.u32 26, %s14
      %v174 = vld [vmem:[%s166] sm:$0xf]
      %v175 = vld [vmem:[%s166 + $0x4] sm:$0xf]
      %v176 = vld [vmem:[%s166 + $0x8] sm:$0xf]
      %v177 = vld [vmem:[%s166 + $0xc] sm:$0xf]
      %v178 = vld [vmem:[%s166 + $0x10] sm:$0xf]
      %v179 = vld [vmem:[%s166 + $0x14] sm:$0xf]
      %v180 = vld [vmem:[%s166 + $0x18] sm:$0xf]
      %v181 = vld [vmem:[%s166 + $0x1c] sm:$0xf]
      %v182 = vld [vmem:[%s166 + $0x20] sm:$0xf]
      %v183 = vld [vmem:[%s166 + $0x24] sm:$0xf]
      %v184 = vld [vmem:[%s166 + $0x28] sm:$0xf]
      %v185 = vld [vmem:[%s166 + $0x2c] sm:$0xf]
      %v186 = vld [vmem:[%s166 + $0x30] sm:$0xf]
      %v187 = vld [vmem:[%s166 + $0x34] sm:$0xf]
      %v188 = vld [vmem:[%s166 + $0x38] sm:$0xf]
      %v189 = vld [vmem:[%s166 + $0x3c] sm:$0xf]
      %v190 = vld [vmem:[%s166 + $0x40] sm:$0xf]
      %v191 = vld [vmem:[%s166 + $0x44] sm:$0xf]
      %v192 = vld [vmem:[%s166 + $0x48] sm:$0xf]
      %v193 = vld [vmem:[%s166 + $0x4c] sm:$0xf]
      %v194 = vld [vmem:[%s166 + $0x50] sm:$0xf]
      %v195 = vld [vmem:[%s166 + $0x54] sm:$0xf]
      %v196 = vld [vmem:[%s166 + $0x58] sm:$0xf]
      %v197 = vld [vmem:[%s166 + $0x5c] sm:$0xf]
      %v198 = vld [vmem:[%s166 + $0x60] sm:$0xf]
      %v199 = vld [vmem:[%s166 + $0x64] sm:$0xf]
      %v200 = vunpack.c.l.bf16 %v174
      %v201 = vunpack.c.l.bf16 %v175
      %v202 = vunpack.c.l.bf16 %v176
      %v203 = vunpack.c.l.bf16 %v177
      %v204 = vunpack.c.l.bf16 %v178
      %v205 = vunpack.c.l.bf16 %v179
      %v206 = vunpack.c.l.bf16 %v180
      %v207 = vunpack.c.l.bf16 %v181
      %v208 = vunpack.c.l.bf16 %v182
      %v209 = vunpack.c.l.bf16 %v183
      %v210 = vunpack.c.l.bf16 %v184
      %v211 = vunpack.c.l.bf16 %v185
      %v212 = vunpack.c.l.bf16 %v186
      %v213 = vunpack.c.l.bf16 %v187
      %v214 = vunpack.c.l.bf16 %v188
      %v215 = vunpack.c.l.bf16 %v189
      %v216 = vunpack.c.l.bf16 %v190
      %v217 = vunpack.c.l.bf16 %v191
      %v218 = vunpack.c.l.bf16 %v192
      %v219 = vunpack.c.l.bf16 %v193
      %v220 = vunpack.c.l.bf16 %v194
      %v221 = vunpack.c.l.bf16 %v195
      %v222 = vunpack.c.l.bf16 %v196
      %v223 = vunpack.c.l.bf16 %v197
      %v224 = vunpack.c.l.bf16 %v198
      %v225 = vunpack.c.l.bf16 %v199
      %v226 = vld [vmem:[%s1] sm:$0x1]
      %v228 = vlaneseq
      %v229 = vshrl.u32 %v228, 7
      %v230 = vsub.s32 0, %v229
      %v231 = vrot.slane %v226, %v230
      %v233 = vmul.f32 %v200, %v231
      %v234 = vmul.f32 %v201, %v231
      %v235 = vmul.f32 %v202, %v231
      %v236 = vmul.f32 %v203, %v231
      %v237 = vmul.f32 %v204, %v231
      %v238 = vmul.f32 %v205, %v231
      %v239 = vmul.f32 %v206, %v231
      %v240 = vmul.f32 %v207, %v231
      %v241 = vmul.f32 %v208, %v231
      %v242 = vmul.f32 %v209, %v231
      %v243 = vmul.f32 %v210, %v231
      %v244 = vmul.f32 %v211, %v231
      %v245 = vmul.f32 %v212, %v231
      %v246 = vmul.f32 %v213, %v231
      %v247 = vmul.f32 %v214, %v231
      %v248 = vmul.f32 %v215, %v231
      %v249 = vmul.f32 %v216, %v231
      %v250 = vmul.f32 %v217, %v231
      %v251 = vmul.f32 %v218, %v231
      %v252 = vmul.f32 %v219, %v231
      %v253 = vmul.f32 %v220, %v231
      %v254 = vmul.f32 %v221, %v231
      %v255 = vmul.f32 %v222, %v231
      %v256 = vmul.f32 %v223, %v231
      %v257 = vmul.f32 %v224, %v231
      %v258 = vmul.f32 %v225, %v231
      %v259 = vld [vmem:[%s2] sm:$0x1]
      %v261 = vlaneseq
      %v262 = vshrl.u32 %v261, 7
      %v263 = vsub.s32 0, %v262
      %v264 = vrot.slane %v259, %v263
      %v266 = vadd.f32 %v233, %v264
      %v267 = vadd.f32 %v234, %v264
      %v268 = vadd.f32 %v235, %v264
      %v269 = vadd.f32 %v236, %v264
      %v270 = vadd.f32 %v237, %v264
      %v271 = vadd.f32 %v238, %v264
      %v272 = vadd.f32 %v239, %v264
      %v273 = vadd.f32 %v240, %v264
      %v274 = vadd.f32 %v241, %v264
      %v275 = vadd.f32 %v242, %v264
      %v276 = vadd.f32 %v243, %v264
      %v277 = vadd.f32 %v244, %v264
      %v278 = vadd.f32 %v245, %v264
      %v279 = vadd.f32 %v246, %v264
      %v280 = vadd.f32 %v247, %v264
      %v281 = vadd.f32 %v248, %v264
      %v282 = vadd.f32 %v249, %v264
      %v283 = vadd.f32 %v250, %v264
      %v284 = vadd.f32 %v251, %v264
      %v285 = vadd.f32 %v252, %v264
      %v286 = vadd.f32 %v253, %v264
      %v287 = vadd.f32 %v254, %v264
      %v288 = vadd.f32 %v255, %v264
      %v289 = vadd.f32 %v256, %v264
      %v290 = vadd.f32 %v257, %v264
      %v291 = vadd.f32 %v258, %v264
      %vm292 = vcmask 64512
      %293 = vst.msk [vmem:[%s172] sm:$0xff] %vm292, %v266
      %294 = vst.msk [vmem:[%s172 + $0x8] sm:$0xff] %vm292, %v267
      %295 = vst.msk [vmem:[%s172 + $0x10] sm:$0xff] %vm292, %v268
      %296 = vst.msk [vmem:[%s172 + $0x18] sm:$0xff] %vm292, %v269
      %297 = vst.msk [vmem:[%s172 + $0x20] sm:$0xff] %vm292, %v270
      %298 = vst.msk [vmem:[%s172 + $0x28] sm:$0xff] %vm292, %v271
      %299 = vst.msk [vmem:[%s172 + $0x30] sm:$0xff] %vm292, %v272
      %300 = vst.msk [vmem:[%s172 + $0x38] sm:$0xff] %vm292, %v273
      %301 = vst.msk [vmem:[%s172 + $0x40] sm:$0xff] %vm292, %v274
      %302 = vst.msk [vmem:[%s172 + $0x48] sm:$0xff] %vm292, %v275
      %303 = vst.msk [vmem:[%s172 + $0x50] sm:$0xff] %vm292, %v276
      %304 = vst.msk [vmem:[%s172 + $0x58] sm:$0xff] %vm292, %v277
      %305 = vst.msk [vmem:[%s172 + $0x60] sm:$0xff] %vm292, %v278
      %306 = vst.msk [vmem:[%s172 + $0x68] sm:$0xff] %vm292, %v279
      %307 = vst.msk [vmem:[%s172 + $0x70] sm:$0xff] %vm292, %v280
      %308 = vst.msk [vmem:[%s172 + $0x78] sm:$0xff] %vm292, %v281
      %309 = vst.msk [vmem:[%s172 + $0x80] sm:$0xff] %vm292, %v282
      %310 = vst.msk [vmem:[%s172 + $0x88] sm:$0xff] %vm292, %v283
      %311 = vst.msk [vmem:[%s172 + $0x90] sm:$0xff] %vm292, %v284
      %312 = vst.msk [vmem:[%s172 + $0x98] sm:$0xff] %vm292, %v285
      %313 = vst.msk [vmem:[%s172 + $0xa0] sm:$0xff] %vm292, %v286
      %314 = vst.msk [vmem:[%s172 + $0xa8] sm:$0xff] %vm292, %v287
      %315 = vst.msk [vmem:[%s172 + $0xb0] sm:$0xff] %vm292, %v288
      %316 = vst.msk [vmem:[%s172 + $0xb8] sm:$0xff] %vm292, %v289
      %317 = vst.msk [vmem:[%s172 + $0xc0] sm:$0xff] %vm292, %v290
      %318 = vst.msk [vmem:[%s172 + $0xc8] sm:$0xff] %vm292, %v291
      %s319 = smul.u32 26, %s14
      %p320 = scmp.lt.s32.totalorder %s319, 51
      %s321 = scalar_select %p320, %s319, 51
      %s322 = smul.addr %s321, 8
      %s323 = scalar_lea.vmem %s3, %s322
      // Predicated region
      $region33: #{d2block_forward.3} parent=31 // pred_check
        %p324 = pneg %p100
      $region34: #{d2block_forward.3} parent=31 // pred_check_branch
        %326 = sbr.rel (%p324) target = $region36
      $region35: #{d2block_forward.3} parent=31 // pred_region
        %s327 = smul.u32 26, %s14
      $region36: #{d2block_forward.3} parent=31 // pred_fallthru
        _
    $region32: #{d2block_forward.3} parent=5 // pred_fallthru
      _
    %p328 = scmp.le.s32.totalorder 2, %s9
    // Predicated region
    $region37: #{d2block_forward.3} parent=5 // pred_check
      %p329 = pneg %p328
    $region38: #{d2block_forward.3} parent=5 // pred_check_branch
      %331 = sbr.rel (%p329) target = $region40
    $region39: #{d2block_forward.3} parent=5 // pred_region
      %s332 = ssub.s32 %s9, 2
      // Predicated region
      $region41: #{d2block_forward.3} parent=39 // pred_check
        %p333 = pneg %p106
      $region42: #{d2block_forward.3} parent=39 // pred_check_branch
        %335 = sbr.rel (%p333) target = $region44
      $region43: #{d2block_forward.3} parent=39 // pred_region
        %s336 = smul.u32 26, %s15
        %p337 = scmp.lt.s32.totalorder %s336, 51
        %s338 = scalar_select %p337, %s336, 51
        %s339 = smul.addr %s338, 8
        %s340 = scalar_lea.vmem %s3, %s339
      $region44: #{d2block_forward.3} parent=39 // pred_fallthru
        _
    $region40: #{d2block_forward.3} parent=5 // pred_fallthru
      _
  $region6: #{d2block_forward.3} parent=0 // loop_footer
    %s13 = sadd.s32 1, %s9
  $region7: #{d2block_forward.3} parent=0 // loop_footer_branch
    %8 = sbr.rel target = $region3
  $region8: #{d2block_forward.3} parent=0 // loop_exit
    _

// kernel: d2block_forward.2
$region0: #{d2block_forward.2}
  #allocation0 [shape = 'u32[]', space=smem, size = 0x4, offset = 0x4, fixed_abs, tag = 'smem constant byte address 0x4 - core index']
  #allocation1 [shape = 'u32[144,128]{1,0:T(1,128)}', space=vmem, size = 0x12000, scoped, tag = 'internal scratch']
  %s0 = inlined_call_operand.vmem [shape: bf16[416,48], index: 0, kind: input, shape index: {}]
  %s1 = inlined_call_operand.vmem [shape: bf16[48,8], index: 1, kind: input, shape index: {}]
  %s2 = inlined_call_operand.vmem [shape: f32[1,8], index: 2, kind: input, shape index: {}]
  %s3 = inlined_call_operand.vmem [shape: bf16[416,8], index: 3, kind: output, shape index: {0}]
  %s4 = inlined_call_operand.vmem [shape: f32[2,2,8], index: 4, kind: output, shape index: {1}]
  %5 = xla_tuple %s3, %s4
  %s6 = sld [smem:[#allocation0]]
  $region61: #{d2block_forward.2} parent=0
    _
  %s8 = ssub.s32 1, %s6
  %s9 = scalar_select 0, %s8, %s6
  loop: start=0, step=1, limit=4
  $region2: #{d2block_forward.2} parent=0 // loop_pre_header
    _
  $region3: #{d2block_forward.2} parent=0 // loop_header
    %s11 = sphi 0, %s15
    %p12 = scmp.ge.s32.totalorder %s11, 4
    %s21 = sphi 0, %s23
    %s24 = sphi 0, %s21
    %s25 = sphi 0, %s24
    %s41 = sphi 0, %s25
    %s45 = sphi 0, %s45
    %s47 = sphi 0, %s45
    %s48 = sphi 0, %s47
    %s62 = sphi 0, %s48
    %s66 = sphi 0, %s66
    %s68 = sphi 0, %s66
    %s69 = sphi 0, %s68
    %s83 = sphi 0, %s69
    %s89 = sphi 0, %s91
    %s92 = sphi 0, %s89
    %s93 = sphi 0, %s92
    %s109 = sphi 0, %s93
    %s115 = sphi 0, %s117
    %s118 = sphi 0, %s115
    %s119 = sphi 0, %s118
    %s135 = sphi 0, %s119
  $region4: #{d2block_forward.2} parent=0 // loop_header_branch
    %14 = sbr.rel (%p12) target = $region8
  $region5: #{d2block_forward.2} parent=0 // loop_body
    %s16 = ssub.s32 %s11, 1
    %s17 = ssub.s32 %s11, 2
    %s18 = sadd.s32 %s11, 1
    %s19 = ssub.s32 %s11, %s18
    %p20 = scmp.eq.s32.totalorder %s19, 0
    %s22 = sadd.s32 %s21, 1
    %s23 = scalar_select %p20, %s21, %s22
    %p26 = pneg %p20
    %p27 = scmp.eq.s32.totalorder %s11, 1
    %p28 = por %p26, %p27
    %p29 = scmp.ne.s32.totalorder %s21, %s24
    %p30 = scmp.eq.s32.totalorder %s11, 0
    %p31 = por %p29, %p30
    %p32 = scmp.ne.s32.totalorder %s21, %s24
    %p33 = scmp.eq.s32.totalorder %s16, 1
    %p34 = por %p32, %p33
    %p35 = scmp.ne.s32.totalorder %s24, %s25
    %p36 = scmp.eq.s32.totalorder %s16, 0
    %p37 = por %p35, %p36
    %p38 = scmp.ne.s32.totalorder %s24, %s25
    %p39 = scmp.eq.s32.totalorder %s17, 1
    %p40 = por %p38, %p39
    %p42 = scmp.ne.s32.totalorder %s25, %s41
    %p43 = scmp.eq.s32.totalorder %s17, 0
    %p44 = por %p42, %p43
    %s46 = sadd.s32 %s45, 1
    %p49 = scmp.eq.s32.totalorder %s11, 1
    %p50 = scmp.ne.s32.totalorder %s45, %s47
    %p51 = scmp.eq.s32.totalorder %s11, 0
    %p52 = por %p50, %p51
    %p53 = scmp.ne.s32.totalorder %s45, %s47
    %p54 = scmp.eq.s32.totalorder %s16, 1
    %p55 = por %p53, %p54
    %p56 = scmp.ne.s32.totalorder %s47, %s48
    %p57 = scmp.eq.s32.totalorder %s16, 0
    %p58 = por %p56, %p57
    %p59 = scmp.ne.s32.totalorder %s47, %s48
    %p60 = scmp.eq.s32.totalorder %s17, 1
    %p61 = por %p59, %p60
    %p63 = scmp.ne.s32.totalorder %s48, %s62
    %p64 = scmp.eq.s32.totalorder %s17, 0
    %p65 = por %p63, %p64
    %s67 = sadd.s32 %s66, 1
    %p70 = scmp.eq.s32.totalorder %s11, 1
    %p71 = scmp.ne.s32.totalorder %s66, %s68
    %p72 = scmp.eq.s32.totalorder %s11, 0
    %p73 = por %p71, %p72
    %p74 = scmp.ne.s32.totalorder %s66, %s68
    %p75 = scmp.eq.s32.totalorder %s16, 1
    %p76 = por %p74, %p75
    %p77 = scmp.ne.s32.totalorder %s68, %s69
    %p78 = scmp.eq.s32.totalorder %s16, 0
    %p79 = por %p77, %p78
    %p80 = scmp.ne.s32.totalorder %s68, %s69
    %p81 = scmp.eq.s32.totalorder %s17, 1
    %p82 = por %p80, %p81
    %p84 = scmp.ne.s32.totalorder %s69, %s83
    %p85 = scmp.eq.s32.totalorder %s17, 0
    %p86 = por %p84, %p85
    %s87 = ssub.s32 %s11, %s18
    %p88 = scmp.eq.s32.totalorder %s87, 0
    %s90 = sadd.s32 %s89, 1
    %s91 = scalar_select %p88, %s89, %s90
    %p94 = pneg %p88
    %p95 = scmp.eq.s32.totalorder %s11, 1
    %p96 = por %p94, %p95
    %p97 = scmp.ne.s32.totalorder %s89, %s92
    %p98 = scmp.eq.s32.totalorder %s11, 0
    %p99 = por %p97, %p98
    %p100 = scmp.ne.s32.totalorder %s89, %s92
    %p101 = scmp.eq.s32.totalorder %s16, 1
    %p102 = por %p100, %p101
    %p103 = scmp.ne.s32.totalorder %s92, %s93
    %p104 = scmp.eq.s32.totalorder %s16, 0
    %p105 = por %p103, %p104
    %p106 = scmp.ne.s32.totalorder %s92, %s93
    %p107 = scmp.eq.s32.totalorder %s17, 1
    %p108 = por %p106, %p107
    %p110 = scmp.ne.s32.totalorder %s93, %s109
    %p111 = scmp.eq.s32.totalorder %s17, 0
    %p112 = por %p110, %p111
    %s113 = ssub.s32 %s11, %s18
    %p114 = scmp.eq.s32.totalorder %s113, 0
    %s116 = sadd.s32 %s115, 1
    %s117 = scalar_select %p114, %s115, %s116
    %p120 = pneg %p114
    %p121 = scmp.eq.s32.totalorder %s11, 1
    %p122 = por %p120, %p121
    %p123 = scmp.ne.s32.totalorder %s115, %s118
    %p124 = scmp.eq.s32.totalorder %s11, 0
    %p125 = por %p123, %p124
    %p126 = scmp.ne.s32.totalorder %s115, %s118
    %p127 = scmp.eq.s32.totalorder %s16, 1
    %p128 = por %p126, %p127
    %p129 = scmp.ne.s32.totalorder %s118, %s119
    %p130 = scmp.eq.s32.totalorder %s16, 0
    %p131 = por %p129, %p130
    %p132 = scmp.ne.s32.totalorder %s118, %s119
    %p133 = scmp.eq.s32.totalorder %s17, 1
    %p134 = por %p132, %p133
    %p136 = scmp.ne.s32.totalorder %s119, %s135
    %p137 = scmp.eq.s32.totalorder %s17, 0
    %p138 = por %p136, %p137
    %p139 = scmp.le.s32.totalorder 1, %s11
    %p140 = scmp.lt.s32.totalorder %s11, 3
    %p141 = pnand %p139, %p140
    %p142 = pneg %p141
    // Predicated region
    $region9: #{d2block_forward.2} parent=5 // pred_check
      _
    $region10: #{d2block_forward.2} parent=5 // pred_check_branch
      %144 = sbr.rel (%p141) target = $region12
    $region11: #{d2block_forward.2} parent=5 // pred_region
      %s145 = ssub.s32 %s11, 1
      // Predicated region
      $region13: #{d2block_forward.2} parent=11 // pred_check
        %p146 = pneg %p58
      $region14: #{d2block_forward.2} parent=11 // pred_check_branch
        %148 = sbr.rel (%p146) target = $region16
      $region15: #{d2block_forward.2} parent=11 // pred_region
        _
      $region16: #{d2block_forward.2} parent=11 // pred_fallthru
        _
      // Predicated region
      $region17: #{d2block_forward.2} parent=11 // pred_check
        %p149 = pneg %p79
      $region18: #{d2block_forward.2} parent=11 // pred_check_branch
        %151 = sbr.rel (%p149) target = $region20
      $region19: #{d2block_forward.2} parent=11 // pred_region
        _
      $region20: #{d2block_forward.2} parent=11 // pred_fallthru
        _
    $region12: #{d2block_forward.2} parent=5 // pred_fallthru
      _
    %p152 = scmp.lt.s32.totalorder %s11, 2
    // Predicated region
    $region21: #{d2block_forward.2} parent=5 // pred_check
      %p153 = pneg %p152
    $region22: #{d2block_forward.2} parent=5 // pred_check_branch
      %155 = sbr.rel (%p153) target = $region24
    $region23: #{d2block_forward.2} parent=5 // pred_region
      // Predicated region
      $region25: #{d2block_forward.2} parent=23 // pred_check
        %p156 = pneg %p31
      $region26: #{d2block_forward.2} parent=23 // pred_check_branch
        %158 = sbr.rel (%p156) target = $region28
      $region27: #{d2block_forward.2} parent=23 // pred_region
        %s159 = smul.u32 26, %s11
        %p160 = scmp.lt.s32.totalorder %s159, 51
        %s161 = scalar_select %p160, %s159, 51
        %s162 = smul.addr %s161, 4
        %s163 = scalar_lea.vmem %s0, %s162
        %s164 = smul.u32 26, %s11
      $region28: #{d2block_forward.2} parent=23 // pred_fallthru
        _
    $region24: #{d2block_forward.2} parent=5 // pred_fallthru
      _
    %p165 = scmp.le.s32.totalorder 1, %s11
    %p166 = scmp.lt.s32.totalorder %s11, 3
    %p167 = pnand %p165, %p166
    %p168 = pneg %p167
    // Predicated region
    $region29: #{d2block_forward.2} parent=5 // pred_check
      _
    $region30: #{d2block_forward.2} parent=5 // pred_check_branch
      %170 = sbr.rel (%p167) target = $region32
    $region31: #{d2block_forward.2} parent=5 // pred_region
      %s171 = ssub.s32 %s11, 1
      %s172 = smul.u32 26, %s16
      %p173 = scmp.lt.s32.totalorder %s172, 51
      %s174 = scalar_select %p173, %s172, 51
      %s175 = smul.addr %s174, 4
      %s176 = scalar_lea.vmem %s0, %s175
      %p177 = pneg %p37
      %p178 = pneg %p34
      %p179 = pneg %p58
      %p180 = pneg %p55
      %p181 = pneg %p79
      %p182 = pneg %p76
      %p183 = pneg %p105
      %p184 = pneg %p102
      %s185 = smul.u32 26, %s16
      %p186 = scmp.lt.s32.totalorder %s185, 51
      %s187 = scalar_select %p186, %s185, 51
      %s188 = smul.addr %s187, 4
      %s189 = scalar_lea.vmem %s3, %s188
      %p190 = pneg %p131
      %p191 = pneg %p128
      %p192 = scmp.lt.s32.totalorder %s16, 1
      %s193 = scalar_select %p192, %s16, 1
      %s194 = smul.addr %s193, 2
      %s195 = scalar_lea.vmem %s4, %s194
      %s196 = smul.u32 26, %s16
      %p197 = scmp.lt.s32.totalorder %s196, 51
      %s198 = scalar_select %p197, %s196, 51
      %s199 = smul.addr %s198, 4
      %s200 = scalar_lea.vmem %s0, %s199
      %s201 = smul.u32 26, %s16
      %s202 = smul.u32 26, %s16
      %p203 = scmp.lt.s32.totalorder %s202, 51
      %s204 = scalar_select %p203, %s202, 51
      %s205 = smul.addr %s204, 4
      %s206 = scalar_lea.vmem %s3, %s205
      %s207 = smul.u32 26, %s16
      %p208 = scmp.lt.s32.totalorder %s16, 1
      %s209 = scalar_select %p208, %s16, 1
      %s210 = smul.addr %s209, 2
      %s211 = scalar_lea.vmem %s4, %s210
      %v213 = vld [vmem:[%s200] sm:$0xf]
      %v214 = vld [vmem:[%s200 + $0x4] sm:$0xf]
      %v215 = vld [vmem:[%s200 + $0x8] sm:$0xf]
      %v216 = vld [vmem:[%s200 + $0xc] sm:$0xf]
      %v217 = vld [vmem:[%s200 + $0x10] sm:$0xf]
      %v218 = vld [vmem:[%s200 + $0x14] sm:$0xf]
      %v219 = vld [vmem:[%s200 + $0x18] sm:$0xf]
      %v220 = vld [vmem:[%s200 + $0x1c] sm:$0xf]
      %v221 = vld [vmem:[%s200 + $0x20] sm:$0xf]
      %v222 = vld [vmem:[%s200 + $0x24] sm:$0xf]
      %v223 = vld [vmem:[%s200 + $0x28] sm:$0xf]
      %v224 = vld [vmem:[%s200 + $0x2c] sm:$0xf]
      %v225 = vld [vmem:[%s200 + $0x30] sm:$0xf]
      %v226 = vld [vmem:[%s200 + $0x34] sm:$0xf]
      %v227 = vld [vmem:[%s200 + $0x38] sm:$0xf]
      %v228 = vld [vmem:[%s200 + $0x3c] sm:$0xf]
      %v229 = vld [vmem:[%s200 + $0x40] sm:$0xf]
      %v230 = vld [vmem:[%s200 + $0x44] sm:$0xf]
      %v231 = vld [vmem:[%s200 + $0x48] sm:$0xf]
      %v232 = vld [vmem:[%s200 + $0x4c] sm:$0xf]
      %v233 = vld [vmem:[%s200 + $0x50] sm:$0xf]
      %v234 = vld [vmem:[%s200 + $0x54] sm:$0xf]
      %v235 = vld [vmem:[%s200 + $0x58] sm:$0xf]
      %v236 = vld [vmem:[%s200 + $0x5c] sm:$0xf]
      %v237 = vld [vmem:[%s200 + $0x60] sm:$0xf]
      %v238 = vld [vmem:[%s200 + $0x64] sm:$0xf]
      %v239 = vld [vmem:[%s1] sm:$0xf]
      %v240 = vld [vmem:[%s1 + $0x4] sm:$0xf]
      %v241 = vld [vmem:[%s1 + $0x8] sm:$0xf]
      %v242 = vld [vmem:[%s1 + $0xc] sm:$0xf]
      %v243 = vld [vmem:[%s1 + $0x10] sm:$0xf]
      %v244 = vld [vmem:[%s1 + $0x14] sm:$0xf]
      %v245 = vld [vmem:[%s2] sm:$0x1]
      %v247 = vlaneseq
      %v248 = vshrl.u32 %v247, 7
      %v249 = vsub.s32 0, %v248
      %v250 = vrot.slane %v245, %v249
      %v278 = vunpack.c.l.b16 %v213
      %v279 = vunpack.c.l.b16 %v214
      %v280 = vunpack.c.l.b16 %v215
      %v281 = vunpack.c.l.b16 %v216
      %v282 = vunpack.c.l.b16 %v217
      %v283 = vunpack.c.l.b16 %v218
      %v284 = vunpack.c.l.b16 %v219
      %v285 = vunpack.c.l.b16 %v220
      %v286 = vunpack.c.l.b16 %v221
      %v287 = vunpack.c.l.b16 %v222
      %v288 = vunpack.c.l.b16 %v223
      %v289 = vunpack.c.l.b16 %v224
      %v290 = vunpack.c.l.b16 %v225
      %v291 = vunpack.c.l.b16 %v226
      %v292 = vunpack.c.l.b16 %v227
      %v293 = vunpack.c.l.b16 %v228
      %v294 = vunpack.c.l.b16 %v229
      %v295 = vunpack.c.l.b16 %v230
      %v296 = vunpack.c.l.b16 %v231
      %v297 = vunpack.c.l.b16 %v232
      %v298 = vunpack.c.l.b16 %v233
      %v299 = vunpack.c.l.b16 %v234
      %v300 = vunpack.c.l.b16 %v235
      %v301 = vunpack.c.l.b16 %v236
      %v302 = vunpack.c.l.b16 %v237
      %v303 = vunpack.c.l.b16 %v238
      %v304 = vpack.c.b16 %v279, %v278
      %v305 = vpack.c.b16 %v281, %v280
      %v306 = vpack.c.b16 %v283, %v282
      %v307 = vpack.c.b16 %v285, %v284
      %v308 = vpack.c.b16 %v287, %v286
      %v309 = vpack.c.b16 %v289, %v288
      %v310 = vpack.c.b16 %v291, %v290
      %v311 = vpack.c.b16 %v293, %v292
      %v312 = vpack.c.b16 %v295, %v294
      %v313 = vpack.c.b16 %v297, %v296
      %v314 = vpack.c.b16 %v299, %v298
      %v315 = vpack.c.b16 %v301, %v300
      %v316 = vpack.c.b16 %v303, %v302
      %v323 = vunpack.c.l.b16 %v239
      %v324 = vunpack.c.l.b16 %v240
      %v325 = vunpack.c.l.b16 %v241
      %v326 = vunpack.c.l.b16 %v242
      %v327 = vunpack.c.l.b16 %v243
      %v328 = vunpack.c.l.b16 %v244
      %v329 = vpack.c.b16 %v324, %v323
      %v330 = vpack.c.b16 %v326, %v325
      %v331 = vpack.c.b16 %v328, %v327
      %vm335 = vcmask 392192
      %v337 = vsel %vm335, %v304, 0
      %v340 = vsel %vm335, %v305, 0
      %v343 = vsel %vm335, %v306, 0
      %v346 = vsel %vm335, %v307, 0
      %v349 = vsel %vm335, %v308, 0
      %v352 = vsel %vm335, %v309, 0
      %v355 = vsel %vm335, %v310, 0
      %v358 = vsel %vm335, %v311, 0
      %v361 = vsel %vm335, %v312, 0
      %v364 = vsel %vm335, %v313, 0
      %v367 = vsel %vm335, %v314, 0
      %v370 = vsel %vm335, %v315, 0
      %v373 = vsel %vm335, %v316, 0
      %375 = vmatprep.subr.bf16.mxu0 0
      %376 = vmatpush1.bf16.msra.mxu0 %v329
      %377 = vmatprep.subr.bf16.mxu0 0
      %378 = vmatpush1.bf16.msra.mxu0 %v330
      %379 = vmatprep.subr.bf16.mxu0 0
      %380 = vmatpush1.bf16.msra.mxu0 %v331
      %381 = vmatprep.subr.bf16.mxu0 0
      %382 = vmatpush1.bf16.msra.mxu0 0
      %383 = vmatprep.subr.bf16.mxu0 0
      %384 = vmatpush1.bf16.msra.mxu0 0
      %385 = vmatprep.subr.bf16.mxu0 0
      %386 = vmatpush1.bf16.msra.mxu0 0
      %387 = vmatprep.subr.bf16.mxu0 0
      %388 = vmatpush1.bf16.msra.mxu0 0
      %389 = vmatprep.subr.bf16.mxu0 0
      %390 = vmatpush1.bf16.msra.mxu0 0
      %391 = vmatprep.subr.bf16.mxu0 0
      %392 = vmatpush1.bf16.msra.mxu0 0
      %393 = vmatprep.subr.bf16.mxu0 0
      %394 = vmatpush1.bf16.msra.mxu0 0
      %395 = vmatprep.subr.bf16.mxu0 0
      %396 = vmatpush1.bf16.msra.mxu0 0
      %397 = vmatprep.subr.bf16.mxu0 0
      %398 = vmatpush1.bf16.msra.mxu0 0
      %399 = vmatprep.subr.bf16.mxu0 0
      %400 = vmatpush1.bf16.msra.mxu0 0
      %401 = vmatprep.subr.bf16.mxu0 0
      %402 = vmatpush1.bf16.msra.mxu0 0
      %403 = vmatprep.subr.bf16.mxu0 0
      %404 = vmatpush1.bf16.msra.mxu0 0
      %405 = vmatprep.subr.bf16.mxu0 0
      %406 = vmatpush1.bf16.msra.mxu0 0
      %407 = vmatprep.mubr.bf16.mxu0 0
      %408 = vmatmul.mubr.bf16.gmra.mrb[0].mxu0 %v337
      %v409 = vpop.f32.mrb[0].mxu0
      %v410 = vadd.f32 %v250, %v409
      %v411 = vpop.f32.mrb[0].mxu0
      %v412 = vpop.f32.mrb[0].mxu0
      %v413 = vadd.f32 %v250, %v412
      %v414 = vpop.f32.mrb[0].mxu0
      %415 = vmatprep.mubr.bf16.mxu0 0
      %416 = vmatmul.mubr.bf16.gmra.mrb[0].mxu0 %v340
      %v417 = vpop.f32.mrb[0].mxu0
      %v418 = vadd.f32 %v250, %v417
      %v419 = vpop.f32.mrb[0].mxu0
      %v420 = vpop.f32.mrb[0].mxu0
      %v421 = vadd.f32 %v250, %v420
      %v422 = vpop.f32.mrb[0].mxu0
      %423 = vmatprep.mubr.bf16.mxu0 0
      %424 = vmatmul.mubr.bf16.gmra.mrb[0].mxu0 %v343
      %v425 = vpop.f32.mrb[0].mxu0
      %v426 = vadd.f32 %v250, %v425
      %v427 = vpop.f32.mrb[0].mxu0
      %v428 = vpop.f32.mrb[0].mxu0
      %v429 = vadd.f32 %v250, %v428
      %v430 = vpop.f32.mrb[0].mxu0
      %431 = vmatprep.mubr.bf16.mxu0 0
      %432 = vmatmul.mubr.bf16.gmra.mrb[0].mxu0 %v346
      %v433 = vpop.f32.mrb[0].mxu0
      %v434 = vadd.f32 %v250, %v433
      %v435 = vpop.f32.mrb[0].mxu0
      %v436 = vpop.f32.mrb[0].mxu0
      %v437 = vadd.f32 %v250, %v436
      %v438 = vpop.f32.mrb[0].mxu0
      %439 = vmatprep.mubr.bf16.mxu0 0
      %440 = vmatmul.mubr.bf16.gmra.mrb[0].mxu0 %v349
      %v441 = vpop.f32.mrb[0].mxu0
      %v442 = vadd.f32 %v250, %v441
      %v443 = vpop.f32.mrb[0].mxu0
      %v444 = vpop.f32.mrb[0].mxu0
      %v445 = vadd.f32 %v250, %v444
      %v446 = vpop.f32.mrb[0].mxu0
      %447 = vmatprep.mubr.bf16.mxu0 0
      %448 = vmatmul.mubr.bf16.gmra.mrb[0].mxu0 %v352
      %v449 = vpop.f32.mrb[0].mxu0
      %v450 = vadd.f32 %v250, %v449
      %v451 = vpop.f32.mrb[0].mxu0
      %v452 = vpop.f32.mrb[0].mxu0
      %v453 = vadd.f32 %v250, %v452
      %v454 = vpop.f32.mrb[0].mxu0
      %455 = vmatprep.mubr.bf16.mxu0 0
      %456 = vmatmul.mubr.bf16.gmra.mrb[0].mxu0 %v355
      %v457 = vpop.f32.mrb[0].mxu0
      %v458 = vadd.f32 %v250, %v457
      %v459 = vpop.f32.mrb[0].mxu0
      %v460 = vpop.f32.mrb[0].mxu0
      %v461 = vadd.f32 %v250, %v460
      %v462 = vpop.f32.mrb[0].mxu0
      %463 = vmatprep.mubr.bf16.mxu0 0
      %464 = vmatmul.mubr.bf16.gmra.mrb[0].mxu0 %v358
      %v465 = vpop.f32.mrb[0].mxu0
      %v466 = vadd.f32 %v250, %v465
      %v467 = vpop.f32.mrb[0].mxu0
      %v468 = vpop.f32.mrb[0].mxu0
      %v469 = vadd.f32 %v250, %v468
      %v470 = vpop.f32.mrb[0].mxu0
      %471 = vmatprep.mubr.bf16.mxu0 0
      %472 = vmatmul.mubr.bf16.gmra.mrb[0].mxu0 %v361
      %v473 = vpop.f32.mrb[0].mxu0
      %v474 = vadd.f32 %v250, %v473
      %v475 = vpop.f32.mrb[0].mxu0
      %v476 = vpop.f32.mrb[0].mxu0
      %v477 = vadd.f32 %v250, %v476
      %v478 = vpop.f32.mrb[0].mxu0
      %479 = vmatprep.mubr.bf16.mxu0 0
      %480 = vmatmul.mubr.bf16.gmra.mrb[0].mxu0 %v364
      %v481 = vpop.f32.mrb[0].mxu0
      %v482 = vadd.f32 %v250, %v481
      %v483 = vpop.f32.mrb[0].mxu0
      %v484 = vpop.f32.mrb[0].mxu0
      %v485 = vadd.f32 %v250, %v484
      %v486 = vpop.f32.mrb[0].mxu0
      %487 = vmatprep.mubr.bf16.mxu0 0
      %488 = vmatmul.mubr.bf16.gmra.mrb[0].mxu0 %v367
      %v489 = vpop.f32.mrb[0].mxu0
      %v490 = vadd.f32 %v250, %v489
      %v491 = vpop.f32.mrb[0].mxu0
      %v492 = vpop.f32.mrb[0].mxu0
      %v493 = vadd.f32 %v250, %v492
      %v494 = vpop.f32.mrb[0].mxu0
      %495 = vmatprep.mubr.bf16.mxu0 0
      %496 = vmatmul.mubr.bf16.gmra.mrb[0].mxu0 %v370
      %v497 = vpop.f32.mrb[0].mxu0
      %v498 = vadd.f32 %v250, %v497
      %v499 = vpop.f32.mrb[0].mxu0
      %v500 = vpop.f32.mrb[0].mxu0
      %v501 = vadd.f32 %v250, %v500
      %v502 = vpop.f32.mrb[0].mxu0
      %503 = vmatprep.mubr.bf16.mxu0 0
      %504 = vmatmul.mubr.bf16.gmra.mrb[0].mxu0 %v373
      %v505 = vpop.f32.mrb[0].mxu0
      %v506 = vadd.f32 %v250, %v505
      %v507 = vpop.f32.mrb[0].mxu0
      %v508 = vpop.f32.mrb[0].mxu0
      %v509 = vadd.f32 %v250, %v508
      %v510 = vpop.f32.mrb[0].mxu0
      %511 = vdwg.mxu0
      %v512 = vmax.f32 %v410, 0.0
      %v513 = vmax.f32 %v413, 0.0
      %v514 = vmax.f32 %v418, 0.0
      %v515 = vmax.f32 %v421, 0.0
      %v516 = vmax.f32 %v426, 0.0
      %v517 = vmax.f32 %v429, 0.0
      %v518 = vmax.f32 %v434, 0.0
      %v519 = vmax.f32 %v437, 0.0
      %v520 = vmax.f32 %v442, 0.0
      %v521 = vmax.f32 %v445, 0.0
      %v522 = vmax.f32 %v450, 0.0
      %v523 = vmax.f32 %v453, 0.0
      %v524 = vmax.f32 %v458, 0.0
      %v525 = vmax.f32 %v461, 0.0
      %v526 = vmax.f32 %v466, 0.0
      %v527 = vmax.f32 %v469, 0.0
      %v528 = vmax.f32 %v474, 0.0
      %v529 = vmax.f32 %v477, 0.0
      %v530 = vmax.f32 %v482, 0.0
      %v531 = vmax.f32 %v485, 0.0
      %v532 = vmax.f32 %v490, 0.0
      %v533 = vmax.f32 %v493, 0.0
      %v534 = vmax.f32 %v498, 0.0
      %v535 = vmax.f32 %v501, 0.0
      %v536 = vmax.f32 %v506, 0.0
      %v537 = vmax.f32 %v509, 0.0
      %v538 = vpack.c.bf16 %v513, %v512
      %v539 = vpack.c.bf16 %v515, %v514
      %v540 = vpack.c.bf16 %v517, %v516
      %v541 = vpack.c.bf16 %v519, %v518
      %v542 = vpack.c.bf16 %v521, %v520
      %v543 = vpack.c.bf16 %v523, %v522
      %v544 = vpack.c.bf16 %v525, %v524
      %v545 = vpack.c.bf16 %v527, %v526
      %v546 = vpack.c.bf16 %v529, %v528
      %v547 = vpack.c.bf16 %v531, %v530
      %v548 = vpack.c.bf16 %v533, %v532
      %v549 = vpack.c.bf16 %v535, %v534
      %v550 = vpack.c.bf16 %v537, %v536
      %v564 = vunpack.c.l.b16 %v538
      %v565 = vunpack.c.h.b16 %v538
      %v566 = vunpack.c.l.b16 %v539
      %v567 = vunpack.c.h.b16 %v539
      %v568 = vunpack.c.l.b16 %v540
      %v569 = vunpack.c.h.b16 %v540
      %v570 = vunpack.c.l.b16 %v541
      %v571 = vunpack.c.h.b16 %v541
      %v572 = vunpack.c.l.b16 %v542
      %v573 = vunpack.c.h.b16 %v542
      %v574 = vunpack.c.l.b16 %v543
      %v575 = vunpack.c.h.b16 %v543
      %v576 = vunpack.c.l.b16 %v544
      %v577 = vunpack.c.h.b16 %v544
      %v578 = vunpack.c.l.b16 %v545
      %v579 = vunpack.c.h.b16 %v545
      %v580 = vunpack.c.l.b16 %v546
      %v581 = vunpack.c.h.b16 %v546
      %v582 = vunpack.c.l.b16 %v547
      %v583 = vunpack.c.h.b16 %v547
      %v584 = vunpack.c.l.b16 %v548
      %v585 = vunpack.c.h.b16 %v548
      %v586 = vunpack.c.l.b16 %v549
      %v587 = vunpack.c.h.b16 %v549
      %v588 = vunpack.c.l.b16 %v550
      %v589 = vunpack.c.h.b16 %v550
      %v590 = vpack.c.b16 %v564, %v564
      %v591 = vpack.c.b16 %v565, %v565
      %v592 = vpack.c.b16 %v566, %v566
      %v593 = vpack.c.b16 %v567, %v567
      %v594 = vpack.c.b16 %v568, %v568
      %v595 = vpack.c.b16 %v569, %v569
      %v596 = vpack.c.b16 %v570, %v570
      %v597 = vpack.c.b16 %v571, %v571
      %v598 = vpack.c.b16 %v572, %v572
      %v599 = vpack.c.b16 %v573, %v573
      %v600 = vpack.c.b16 %v574, %v574
      %v601 = vpack.c.b16 %v575, %v575
      %v602 = vpack.c.b16 %v576, %v576
      %v603 = vpack.c.b16 %v577, %v577
      %v604 = vpack.c.b16 %v578, %v578
      %v605 = vpack.c.b16 %v579, %v579
      %v606 = vpack.c.b16 %v580, %v580
      %v607 = vpack.c.b16 %v581, %v581
      %v608 = vpack.c.b16 %v582, %v582
      %v609 = vpack.c.b16 %v583, %v583
      %v610 = vpack.c.b16 %v584, %v584
      %v611 = vpack.c.b16 %v585, %v585
      %v612 = vpack.c.b16 %v586, %v586
      %v613 = vpack.c.b16 %v587, %v587
      %v614 = vpack.c.b16 %v588, %v588
      %v615 = vpack.c.b16 %v589, %v589
      %vm642 = vcmask 60416
      %643 = vst.msk [vmem:[%s206] sm:$0xf] %vm642, %v590
      %644 = vst.msk [vmem:[%s206 + $0x4] sm:$0xf] %vm642, %v591
      %645 = vst.msk [vmem:[%s206 + $0x8] sm:$0xf] %vm642, %v592
      %646 = vst.msk [vmem:[%s206 + $0xc] sm:$0xf] %vm642, %v593
      %647 = vst.msk [vmem:[%s206 + $0x10] sm:$0xf] %vm642, %v594
      %648 = vst.msk [vmem:[%s206 + $0x14] sm:$0xf] %vm642, %v595
      %649 = vst.msk [vmem:[%s206 + $0x18] sm:$0xf] %vm642, %v596
      %650 = vst.msk [vmem:[%s206 + $0x1c] sm:$0xf] %vm642, %v597
      %651 = vst.msk [vmem:[%s206 + $0x20] sm:$0xf] %vm642, %v598
      %652 = vst.msk [vmem:[%s206 + $0x24] sm:$0xf] %vm642, %v599
      %653 = vst.msk [vmem:[%s206 + $0x28] sm:$0xf] %vm642, %v600
      %654 = vst.msk [vmem:[%s206 + $0x2c] sm:$0xf] %vm642, %v601
      %655 = vst.msk [vmem:[%s206 + $0x30] sm:$0xf] %vm642, %v602
      %656 = vst.msk [vmem:[%s206 + $0x34] sm:$0xf] %vm642, %v603
      %657 = vst.msk [vmem:[%s206 + $0x38] sm:$0xf] %vm642, %v604
      %658 = vst.msk [vmem:[%s206 + $0x3c] sm:$0xf] %vm642, %v605
      %659 = vst.msk [vmem:[%s206 + $0x40] sm:$0xf] %vm642, %v606
      %660 = vst.msk [vmem:[%s206 + $0x44] sm:$0xf] %vm642, %v607
      %661 = vst.msk [vmem:[%s206 + $0x48] sm:$0xf] %vm642, %v608
      %662 = vst.msk [vmem:[%s206 + $0x4c] sm:$0xf] %vm642, %v609
      %663 = vst.msk [vmem:[%s206 + $0x50] sm:$0xf] %vm642, %v610
      %664 = vst.msk [vmem:[%s206 + $0x54] sm:$0xf] %vm642, %v611
      %665 = vst.msk [vmem:[%s206 + $0x58] sm:$0xf] %vm642, %v612
      %666 = vst.msk [vmem:[%s206 + $0x5c] sm:$0xf] %vm642, %v613
      %667 = vst.msk [vmem:[%s206 + $0x60] sm:$0xf] %vm642, %v614
      %668 = vst.msk [vmem:[%s206 + $0x64] sm:$0xf] %vm642, %v615
      %p669 = scmp.lt.s32.totalorder %s16, 1
      // Predicated region
      $region33: #{d2block_forward.2} parent=31 // pred_check
        %p670 = pneg %p669
      $region34: #{d2block_forward.2} parent=31 // pred_check_branch
        %672 = sbr.rel (%p670) target = $region36
      $region35: #{d2block_forward.2} parent=31 // pred_region
        %vm673 = vcmask 64512
        %v674 = vsel %vm673, %v512, 0.0
        %v675 = vsel %vm673, %v513, 0.0
        %v676 = vadd.f32 %v674, %v675
        %v677 = vsel %vm673, %v514, 0.0
        %v678 = vadd.f32 %v676, %v677
        %v679 = vsel %vm673, %v515, 0.0
        %v680 = vadd.f32 %v678, %v679
        %v681 = vsel %vm673, %v516, 0.0
        %v682 = vadd.f32 %v680, %v681
        %v683 = vsel %vm673, %v517, 0.0
        %v684 = vadd.f32 %v682, %v683
        %v685 = vsel %vm673, %v518, 0.0
        %v686 = vadd.f32 %v684, %v685
        %v687 = vsel %vm673, %v519, 0.0
        %v688 = vadd.f32 %v686, %v687
        %v689 = vsel %vm673, %v520, 0.0
        %v690 = vadd.f32 %v688, %v689
        %v691 = vsel %vm673, %v521, 0.0
        %v692 = vadd.f32 %v690, %v691
        %v693 = vsel %vm673, %v522, 0.0
        %v694 = vadd.f32 %v692, %v693
        %v695 = vsel %vm673, %v523, 0.0
        %v696 = vadd.f32 %v694, %v695
        %v697 = vsel %vm673, %v524, 0.0
        %v698 = vadd.f32 %v696, %v697
        %v699 = vsel %vm673, %v525, 0.0
        %v700 = vadd.f32 %v698, %v699
        %v701 = vsel %vm673, %v526, 0.0
        %v702 = vadd.f32 %v700, %v701
        %v703 = vsel %vm673, %v527, 0.0
        %v704 = vadd.f32 %v702, %v703
        %v705 = vsel %vm673, %v528, 0.0
        %v706 = vadd.f32 %v704, %v705
        %v707 = vsel %vm673, %v529, 0.0
        %v708 = vadd.f32 %v706, %v707
        %v709 = vsel %vm673, %v530, 0.0
        %v710 = vadd.f32 %v708, %v709
        %v711 = vsel %vm673, %v531, 0.0
        %v712 = vadd.f32 %v710, %v711
        %v713 = vsel %vm673, %v532, 0.0
        %v714 = vadd.f32 %v712, %v713
        %v715 = vsel %vm673, %v533, 0.0
        %v716 = vadd.f32 %v714, %v715
        %v717 = vsel %vm673, %v534, 0.0
        %v718 = vadd.f32 %v716, %v717
        %v719 = vsel %vm673, %v535, 0.0
        %v720 = vadd.f32 %v718, %v719
        %v721 = vsel %vm673, %v536, 0.0
        %v722 = vadd.f32 %v720, %v721
        %v723 = vsel %vm673, %v537, 0.0
        %v724 = vadd.f32 %v722, %v723
        %v725 = vrot.slane %v724, 4
        %v726 = vadd.f32 %v724, %v725
        %v727 = vrot.slane %v726, 2
        %v728 = vadd.f32 %v726, %v727
        %v729 = vrot.slane %v728, 1
        %v730 = vadd.f32 %v728, %v729
        %v731 = vmul.f32 %v730, 0.0048076925
        %v732 = vsub.f32 %v512, %v731
        %v733 = vsub.f32 %v513, %v731
        %v734 = vsub.f32 %v514, %v731
        %v735 = vsub.f32 %v515, %v731
        %v736 = vsub.f32 %v516, %v731
        %v737 = vsub.f32 %v517, %v731
        %v738 = vsub.f32 %v518, %v731
        %v739 = vsub.f32 %v519, %v731
        %v740 = vsub.f32 %v520, %v731
        %v741 = vsub.f32 %v521, %v731
        %v742 = vsub.f32 %v522, %v731
        %v743 = vsub.f32 %v523, %v731
        %v744 = vsub.f32 %v524, %v731
        %v745 = vsub.f32 %v525, %v731
        %v746 = vsub.f32 %v526, %v731
        %v747 = vsub.f32 %v527, %v731
        %v748 = vsub.f32 %v528, %v731
        %v749 = vsub.f32 %v529, %v731
        %v750 = vsub.f32 %v530, %v731
        %v751 = vsub.f32 %v531, %v731
        %v752 = vsub.f32 %v532, %v731
        %v753 = vsub.f32 %v533, %v731
        %v754 = vsub.f32 %v534, %v731
        %v755 = vsub.f32 %v535, %v731
        %v756 = vsub.f32 %v536, %v731
        %v757 = vsub.f32 %v537, %v731
        %vm758 = vcmask 57344
        %759 = vst.msk [vmem:[%s211] sm:$0x1] %vm758, %v730
        %v760 = vmul.f32 %v732, %v732
        %v761 = vmul.f32 %v733, %v733
        %v762 = vmul.f32 %v734, %v734
        %v763 = vmul.f32 %v735, %v735
        %v764 = vmul.f32 %v736, %v736
        %v765 = vmul.f32 %v737, %v737
        %v766 = vmul.f32 %v738, %v738
        %v767 = vmul.f32 %v739, %v739
        %v768 = vmul.f32 %v740, %v740
        %v769 = vmul.f32 %v741, %v741
        %v770 = vmul.f32 %v742, %v742
        %v771 = vmul.f32 %v743, %v743
        %v772 = vmul.f32 %v744, %v744
        %v773 = vmul.f32 %v745, %v745
        %v774 = vmul.f32 %v746, %v746
        %v775 = vmul.f32 %v747, %v747
        %v776 = vmul.f32 %v748, %v748
        %v777 = vmul.f32 %v749, %v749
        %v778 = vmul.f32 %v750, %v750
        %v779 = vmul.f32 %v751, %v751
        %v780 = vmul.f32 %v752, %v752
        %v781 = vmul.f32 %v753, %v753
        %v782 = vmul.f32 %v754, %v754
        %v783 = vmul.f32 %v755, %v755
        %v784 = vmul.f32 %v756, %v756
        %v785 = vmul.f32 %v757, %v757
        %v786 = vsel %vm673, %v760, 0.0
        %v787 = vsel %vm673, %v761, 0.0
        %v788 = vadd.f32 %v786, %v787
        %v789 = vsel %vm673, %v762, 0.0
        %v790 = vadd.f32 %v788, %v789
        %v791 = vsel %vm673, %v763, 0.0
        %v792 = vadd.f32 %v790, %v791
        %v793 = vsel %vm673, %v764, 0.0
        %v794 = vadd.f32 %v792, %v793
        %v795 = vsel %vm673, %v765, 0.0
        %v796 = vadd.f32 %v794, %v795
        %v797 = vsel %vm673, %v766, 0.0
        %v798 = vadd.f32 %v796, %v797
        %v799 = vsel %vm673, %v767, 0.0
        %v800 = vadd.f32 %v798, %v799
        %v801 = vsel %vm673, %v768, 0.0
        %v802 = vadd.f32 %v800, %v801
        %v803 = vsel %vm673, %v769, 0.0
        %v804 = vadd.f32 %v802, %v803
        %v805 = vsel %vm673, %v770, 0.0
        %v806 = vadd.f32 %v804, %v805
        %v807 = vsel %vm673, %v771, 0.0
        %v808 = vadd.f32 %v806, %v807
        %v809 = vsel %vm673, %v772, 0.0
        %v810 = vadd.f32 %v808, %v809
        %v811 = vsel %vm673, %v773, 0.0
        %v812 = vadd.f32 %v810, %v811
        %v813 = vsel %vm673, %v774, 0.0
        %v814 = vadd.f32 %v812, %v813
        %v815 = vsel %vm673, %v775, 0.0
        %v816 = vadd.f32 %v814, %v815
        %v817 = vsel %vm673, %v776, 0.0
        %v818 = vadd.f32 %v816, %v817
        %v819 = vsel %vm673, %v777, 0.0
        %v820 = vadd.f32 %v818, %v819
        %v821 = vsel %vm673, %v778, 0.0
        %v822 = vadd.f32 %v820, %v821
        %v823 = vsel %vm673, %v779, 0.0
        %v824 = vadd.f32 %v822, %v823
        %v825 = vsel %vm673, %v780, 0.0
        %v826 = vadd.f32 %v824, %v825
        %v827 = vsel %vm673, %v781, 0.0
        %v828 = vadd.f32 %v826, %v827
        %v829 = vsel %vm673, %v782, 0.0
        %v830 = vadd.f32 %v828, %v829
        %v831 = vsel %vm673, %v783, 0.0
        %v832 = vadd.f32 %v830, %v831
        %v833 = vsel %vm673, %v784, 0.0
        %v834 = vadd.f32 %v832, %v833
        %v835 = vsel %vm673, %v785, 0.0
        %v836 = vadd.f32 %v834, %v835
        %v837 = vrot.slane %v836, 4
        %v838 = vadd.f32 %v836, %v837
        %v839 = vrot.slane %v838, 2
        %v840 = vadd.f32 %v838, %v839
        %v841 = vrot.slane %v840, 1
        %v842 = vadd.f32 %v840, %v841
        %843 = vst.msk [vmem:[%s211 + $0x1] sm:$0x1] %vm758, %v842
      $region36: #{d2block_forward.2} parent=31 // pred_fallthru
        _
      %p844 = scmp.ge.s32.totalorder %s16, 1
      // Predicated region
      $region37: #{d2block_forward.2} parent=31 // pred_check
        %p845 = pneg %p844
      $region38: #{d2block_forward.2} parent=31 // pred_check_branch
        %847 = sbr.rel (%p845) target = $region40
      $region39: #{d2block_forward.2} parent=31 // pred_region
        %v848 = vlaneseq
        %v849 = vshrl.u32 %v848, 7
        %v850 = vadd.s32 %v849, 8
        %v851 = vadd.s32 %v849, 16
        %v852 = vadd.s32 %v849, 24
        %v853 = vadd.s32 %v849, 32
        %v854 = vadd.s32 %v849, 40
        %v855 = vadd.s32 %v849, 48
        %v856 = vadd.s32 %v849, 56
        %v857 = vadd.s32 %v849, 64
        %v858 = vadd.s32 %v849, 72
        %v859 = vadd.s32 %v849, 80
        %v860 = vadd.s32 %v849, 88
        %v861 = vadd.s32 %v849, 96
        %v862 = vadd.s32 %v849, 104
        %v863 = vadd.s32 %v849, 112
        %v864 = vadd.s32 %v849, 120
        %v865 = vadd.s32 %v849, 128
        %v866 = vadd.s32 %v849, 136
        %v867 = vadd.s32 %v849, 144
        %v868 = vadd.s32 %v849, 152
        %v869 = vadd.s32 %v849, 160
        %v870 = vadd.s32 %v849, 168
        %v871 = vadd.s32 %v849, 176
        %v872 = vadd.s32 %v849, 184
        %v873 = vadd.s32 %v849, 192
        %v874 = vadd.s32 %v849, 200
        %vm875 = vcmp.lt.s32.totalorder %v849, 184
        %vm876 = vcmp.lt.s32.totalorder %v850, 184
        %vm877 = vcmp.lt.s32.totalorder %v851, 184
        %vm878 = vcmp.lt.s32.totalorder %v852, 184
        %vm879 = vcmp.lt.s32.totalorder %v853, 184
        %vm880 = vcmp.lt.s32.totalorder %v854, 184
        %vm881 = vcmp.lt.s32.totalorder %v855, 184
        %vm882 = vcmp.lt.s32.totalorder %v856, 184
        %vm883 = vcmp.lt.s32.totalorder %v857, 184
        %vm884 = vcmp.lt.s32.totalorder %v858, 184
        %vm885 = vcmp.lt.s32.totalorder %v859, 184
        %vm886 = vcmp.lt.s32.totalorder %v860, 184
        %vm887 = vcmp.lt.s32.totalorder %v861, 184
        %vm888 = vcmp.lt.s32.totalorder %v862, 184
        %vm889 = vcmp.lt.s32.totalorder %v863, 184
        %vm890 = vcmp.lt.s32.totalorder %v864, 184
        %vm891 = vcmp.lt.s32.totalorder %v865, 184
        %vm892 = vcmp.lt.s32.totalorder %v866, 184
        %vm893 = vcmp.lt.s32.totalorder %v867, 184
        %vm894 = vcmp.lt.s32.totalorder %v868, 184
        %vm895 = vcmp.lt.s32.totalorder %v869, 184
        %vm896 = vcmp.lt.s32.totalorder %v870, 184
        %vm897 = vcmp.lt.s32.totalorder %v871, 184
        %vm898 = vcmp.lt.s32.totalorder %v872, 184
        %vm899 = vcmp.lt.s32.totalorder %v873, 184
        %vm900 = vcmp.lt.s32.totalorder %v874, 184
        %v901 = vsel %vm875, 1, 0
        %v902 = vsel %vm876, 1, 0
        %v903 = vsel %vm877, 1, 0
        %v904 = vsel %vm878, 1, 0
        %v905 = vsel %vm879, 1, 0
        %v906 = vsel %vm880, 1, 0
        %v907 = vsel %vm881, 1, 0
        %v908 = vsel %vm882, 1, 0
        %v909 = vsel %vm883, 1, 0
        %v910 = vsel %vm884, 1, 0
        %v911 = vsel %vm885, 1, 0
        %v912 = vsel %vm886, 1, 0
        %v913 = vsel %vm887, 1, 0
        %v914 = vsel %vm888, 1, 0
        %v915 = vsel %vm889, 1, 0
        %v916 = vsel %vm890, 1, 0
        %v917 = vsel %vm891, 1, 0
        %v918 = vsel %vm892, 1, 0
        %v919 = vsel %vm893, 1, 0
        %v920 = vsel %vm894, 1, 0
        %v921 = vsel %vm895, 1, 0
        %v922 = vsel %vm896, 1, 0
        %v923 = vsel %vm897, 1, 0
        %v924 = vsel %vm898, 1, 0
        %v925 = vsel %vm899, 1, 0
        %v926 = vsel %vm900, 1, 0
        %vm927 = vcmp.eq.s32.totalorder %v901, 1
        %vm928 = vcmp.eq.s32.totalorder %v902, 1
        %vm929 = vcmp.eq.s32.totalorder %v903, 1
        %vm930 = vcmp.eq.s32.totalorder %v904, 1
        %vm931 = vcmp.eq.s32.totalorder %v905, 1
        %vm932 = vcmp.eq.s32.totalorder %v906, 1
        %vm933 = vcmp.eq.s32.totalorder %v907, 1
        %vm934 = vcmp.eq.s32.totalorder %v908, 1
        %vm935 = vcmp.eq.s32.totalorder %v909, 1
        %vm936 = vcmp.eq.s32.totalorder %v910, 1
        %vm937 = vcmp.eq.s32.totalorder %v911, 1
        %vm938 = vcmp.eq.s32.totalorder %v912, 1
        %vm939 = vcmp.eq.s32.totalorder %v913, 1
        %vm940 = vcmp.eq.s32.totalorder %v914, 1
        %vm941 = vcmp.eq.s32.totalorder %v915, 1
        %vm942 = vcmp.eq.s32.totalorder %v916, 1
        %vm943 = vcmp.eq.s32.totalorder %v917, 1
        %vm944 = vcmp.eq.s32.totalorder %v918, 1
        %vm945 = vcmp.eq.s32.totalorder %v919, 1
        %vm946 = vcmp.eq.s32.totalorder %v920, 1
        %vm947 = vcmp.eq.s32.totalorder %v921, 1
        %vm948 = vcmp.eq.s32.totalorder %v922, 1
        %vm949 = vcmp.eq.s32.totalorder %v923, 1
        %vm950 = vcmp.eq.s32.totalorder %v924, 1
        %vm951 = vcmp.eq.s32.totalorder %v925, 1
        %vm952 = vcmp.eq.s32.totalorder %v926, 1
        %v953 = vsel %vm927, %v512, 0.0
        %v954 = vsel %vm928, %v513, 0.0
        %v955 = vsel %vm929, %v514, 0.0
        %v956 = vsel %vm930, %v515, 0.0
        %v957 = vsel %vm931, %v516, 0.0
        %v958 = vsel %vm932, %v517, 0.0
        %v959 = vsel %vm933, %v518, 0.0
        %v960 = vsel %vm934, %v519, 0.0
        %v961 = vsel %vm935, %v520, 0.0
        %v962 = vsel %vm936, %v521, 0.0
        %v963 = vsel %vm937, %v522, 0.0
        %v964 = vsel %vm938, %v523, 0.0
        %v965 = vsel %vm939, %v524, 0.0
        %v966 = vsel %vm940, %v525, 0.0
        %v967 = vsel %vm941, %v526, 0.0
        %v968 = vsel %vm942, %v527, 0.0
        %v969 = vsel %vm943, %v528, 0.0
        %v970 = vsel %vm944, %v529, 0.0
        %v971 = vsel %vm945, %v530, 0.0
        %v972 = vsel %vm946, %v531, 0.0
        %v973 = vsel %vm947, %v532, 0.0
        %v974 = vsel %vm948, %v533, 0.0
        %v975 = vsel %vm949, %v534, 0.0
        %v976 = vsel %vm950, %v535, 0.0
        %v977 = vsel %vm951, %v536, 0.0
        %v978 = vsel %vm952, %v537, 0.0
        %vm979 = vcmask 64512
        %v980 = vsel %vm979, %v953, 0.0
        %v981 = vsel %vm979, %v954, 0.0
        %v982 = vadd.f32 %v980, %v981
        %v983 = vsel %vm979, %v955, 0.0
        %v984 = vadd.f32 %v982, %v983
        %v985 = vsel %vm979, %v956, 0.0
        %v986 = vadd.f32 %v984, %v985
        %v987 = vsel %vm979, %v957, 0.0
        %v988 = vadd.f32 %v986, %v987
        %v989 = vsel %vm979, %v958, 0.0
        %v990 = vadd.f32 %v988, %v989
        %v991 = vsel %vm979, %v959, 0.0
        %v992 = vadd.f32 %v990, %v991
        %v993 = vsel %vm979, %v960, 0.0
        %v994 = vadd.f32 %v992, %v993
        %v995 = vsel %vm979, %v961, 0.0
        %v996 = vadd.f32 %v994, %v995
        %v997 = vsel %vm979, %v962, 0.0
        %v998 = vadd.f32 %v996, %v997
        %v999 = vsel %vm979, %v963, 0.0
        %v1000 = vadd.f32 %v998, %v999
        %v1001 = vsel %vm979, %v964, 0.0
        %v1002 = vadd.f32 %v1000, %v1001
        %v1003 = vsel %vm979, %v965, 0.0
        %v1004 = vadd.f32 %v1002, %v1003
        %v1005 = vsel %vm979, %v966, 0.0
        %v1006 = vadd.f32 %v1004, %v1005
        %v1007 = vsel %vm979, %v967, 0.0
        %v1008 = vadd.f32 %v1006, %v1007
        %v1009 = vsel %vm979, %v968, 0.0
        %v1010 = vadd.f32 %v1008, %v1009
        %v1011 = vsel %vm979, %v969, 0.0
        %v1012 = vadd.f32 %v1010, %v1011
        %v1013 = vsel %vm979, %v970, 0.0
        %v1014 = vadd.f32 %v1012, %v1013
        %v1015 = vsel %vm979, %v971, 0.0
        %v1016 = vadd.f32 %v1014, %v1015
        %v1017 = vsel %vm979, %v972, 0.0
        %v1018 = vadd.f32 %v1016, %v1017
        %v1019 = vsel %vm979, %v973, 0.0
        %v1020 = vadd.f32 %v1018, %v1019
        %v1021 = vsel %vm979, %v974, 0.0
        %v1022 = vadd.f32 %v1020, %v1021
        %v1023 = vsel %vm979, %v975, 0.0
        %v1024 = vadd.f32 %v1022, %v1023
        %v1025 = vsel %vm979, %v976, 0.0
        %v1026 = vadd.f32 %v1024, %v1025
        %v1027 = vsel %vm979, %v977, 0.0
        %v1028 = vadd.f32 %v1026, %v1027
        %v1029 = vsel %vm979, %v978, 0.0
        %v1030 = vadd.f32 %v1028, %v1029
        %v1031 = vrot.slane %v1030, 4
        %v1032 = vadd.f32 %v1030, %v1031
        %v1033 = vrot.slane %v1032, 2
        %v1034 = vadd.f32 %v1032, %v1033
        %v1035 = vrot.slane %v1034, 1
        %v1036 = vadd.f32 %v1034, %v1035
        %v1037 = vmul.f32 %v1036, 0.0054347827
        %v1038 = vsub.f32 %v512, %v1037
        %v1039 = vsub.f32 %v513, %v1037
        %v1040 = vsub.f32 %v514, %v1037
        %v1041 = vsub.f32 %v515, %v1037
        %v1042 = vsub.f32 %v516, %v1037
        %v1043 = vsub.f32 %v517, %v1037
        %v1044 = vsub.f32 %v518, %v1037
        %v1045 = vsub.f32 %v519, %v1037
        %v1046 = vsub.f32 %v520, %v1037
        %v1047 = vsub.f32 %v521, %v1037
        %v1048 = vsub.f32 %v522, %v1037
        %v1049 = vsub.f32 %v523, %v1037
        %v1050 = vsub.f32 %v524, %v1037
        %v1051 = vsub.f32 %v525, %v1037
        %v1052 = vsub.f32 %v526, %v1037
        %v1053 = vsub.f32 %v527, %v1037
        %v1054 = vsub.f32 %v528, %v1037
        %v1055 = vsub.f32 %v529, %v1037
        %v1056 = vsub.f32 %v530, %v1037
        %v1057 = vsub.f32 %v531, %v1037
        %v1058 = vsub.f32 %v532, %v1037
        %v1059 = vsub.f32 %v533, %v1037
        %v1060 = vsub.f32 %v534, %v1037
        %v1061 = vsub.f32 %v535, %v1037
        %v1062 = vsub.f32 %v536, %v1037
        %v1063 = vsub.f32 %v537, %v1037
        %v1064 = vsel %vm927, %v1038, 0.0
        %v1065 = vsel %vm928, %v1039, 0.0
        %v1066 = vsel %vm929, %v1040, 0.0
        %v1067 = vsel %vm930, %v1041, 0.0
        %v1068 = vsel %vm931, %v1042, 0.0
        %v1069 = vsel %vm932, %v1043, 0.0
        %v1070 = vsel %vm933, %v1044, 0.0
        %v1071 = vsel %vm934, %v1045, 0.0
        %v1072 = vsel %vm935, %v1046, 0.0
        %v1073 = vsel %vm936, %v1047, 0.0
        %v1074 = vsel %vm937, %v1048, 0.0
        %v1075 = vsel %vm938, %v1049, 0.0
        %v1076 = vsel %vm939, %v1050, 0.0
        %v1077 = vsel %vm940, %v1051, 0.0
        %v1078 = vsel %vm941, %v1052, 0.0
        %v1079 = vsel %vm942, %v1053, 0.0
        %v1080 = vsel %vm943, %v1054, 0.0
        %v1081 = vsel %vm944, %v1055, 0.0
        %v1082 = vsel %vm945, %v1056, 0.0
        %v1083 = vsel %vm946, %v1057, 0.0
        %v1084 = vsel %vm947, %v1058, 0.0
        %v1085 = vsel %vm948, %v1059, 0.0
        %v1086 = vsel %vm949, %v1060, 0.0
        %v1087 = vsel %vm950, %v1061, 0.0
        %v1088 = vsel %vm951, %v1062, 0.0
        %v1089 = vsel %vm952, %v1063, 0.0
        %vm1090 = vcmask 57344
        %1091 = vst.msk [vmem:[%s211] sm:$0x1] %vm1090, %v1036
        %v1092 = vmul.f32 %v1064, %v1064
        %v1093 = vmul.f32 %v1065, %v1065
        %v1094 = vmul.f32 %v1066, %v1066
        %v1095 = vmul.f32 %v1067, %v1067
        %v1096 = vmul.f32 %v1068, %v1068
        %v1097 = vmul.f32 %v1069, %v1069
        %v1098 = vmul.f32 %v1070, %v1070
        %v1099 = vmul.f32 %v1071, %v1071
        %v1100 = vmul.f32 %v1072, %v1072
        %v1101 = vmul.f32 %v1073, %v1073
        %v1102 = vmul.f32 %v1074, %v1074
        %v1103 = vmul.f32 %v1075, %v1075
        %v1104 = vmul.f32 %v1076, %v1076
        %v1105 = vmul.f32 %v1077, %v1077
        %v1106 = vmul.f32 %v1078, %v1078
        %v1107 = vmul.f32 %v1079, %v1079
        %v1108 = vmul.f32 %v1080, %v1080
        %v1109 = vmul.f32 %v1081, %v1081
        %v1110 = vmul.f32 %v1082, %v1082
        %v1111 = vmul.f32 %v1083, %v1083
        %v1112 = vmul.f32 %v1084, %v1084
        %v1113 = vmul.f32 %v1085, %v1085
        %v1114 = vmul.f32 %v1086, %v1086
        %v1115 = vmul.f32 %v1087, %v1087
        %v1116 = vmul.f32 %v1088, %v1088
        %v1117 = vmul.f32 %v1089, %v1089
        %v1118 = vsel %vm979, %v1092, 0.0
        %v1119 = vsel %vm979, %v1093, 0.0
        %v1120 = vadd.f32 %v1118, %v1119
        %v1121 = vsel %vm979, %v1094, 0.0
        %v1122 = vadd.f32 %v1120, %v1121
        %v1123 = vsel %vm979, %v1095, 0.0
        %v1124 = vadd.f32 %v1122, %v1123
        %v1125 = vsel %vm979, %v1096, 0.0
        %v1126 = vadd.f32 %v1124, %v1125
        %v1127 = vsel %vm979, %v1097, 0.0
        %v1128 = vadd.f32 %v1126, %v1127
        %v1129 = vsel %vm979, %v1098, 0.0
        %v1130 = vadd.f32 %v1128, %v1129
        %v1131 = vsel %vm979, %v1099, 0.0
        %v1132 = vadd.f32 %v1130, %v1131
        %v1133 = vsel %vm979, %v1100, 0.0
        %v1134 = vadd.f32 %v1132, %v1133
        %v1135 = vsel %vm979, %v1101, 0.0
        %v1136 = vadd.f32 %v1134, %v1135
        %v1137 = vsel %vm979, %v1102, 0.0
        %v1138 = vadd.f32 %v1136, %v1137
        %v1139 = vsel %vm979, %v1103, 0.0
        %v1140 = vadd.f32 %v1138, %v1139
        %v1141 = vsel %vm979, %v1104, 0.0
        %v1142 = vadd.f32 %v1140, %v1141
        %v1143 = vsel %vm979, %v1105, 0.0
        %v1144 = vadd.f32 %v1142, %v1143
        %v1145 = vsel %vm979, %v1106, 0.0
        %v1146 = vadd.f32 %v1144, %v1145
        %v1147 = vsel %vm979, %v1107, 0.0
        %v1148 = vadd.f32 %v1146, %v1147
        %v1149 = vsel %vm979, %v1108, 0.0
        %v1150 = vadd.f32 %v1148, %v1149
        %v1151 = vsel %vm979, %v1109, 0.0
        %v1152 = vadd.f32 %v1150, %v1151
        %v1153 = vsel %vm979, %v1110, 0.0
        %v1154 = vadd.f32 %v1152, %v1153
        %v1155 = vsel %vm979, %v1111, 0.0
        %v1156 = vadd.f32 %v1154, %v1155
        %v1157 = vsel %vm979, %v1112, 0.0
        %v1158 = vadd.f32 %v1156, %v1157
        %v1159 = vsel %vm979, %v1113, 0.0
        %v1160 = vadd.f32 %v1158, %v1159
        %v1161 = vsel %vm979, %v1114, 0.0
        %v1162 = vadd.f32 %v1160, %v1161
        %v1163 = vsel %vm979, %v1115, 0.0
        %v1164 = vadd.f32 %v1162, %v1163
        %v1165 = vsel %vm979, %v1116, 0.0
        %v1166 = vadd.f32 %v1164, %v1165
        %v1167 = vsel %vm979, %v1117, 0.0
        %v1168 = vadd.f32 %v1166, %v1167
        %v1169 = vrot.slane %v1168, 4
        %v1170 = vadd.f32 %v1168, %v1169
        %v1171 = vrot.slane %v1170, 2
        %v1172 = vadd.f32 %v1170, %v1171
        %v1173 = vrot.slane %v1172, 1
        %v1174 = vadd.f32 %v1172, %v1173
        %1175 = vst.msk [vmem:[%s211 + $0x1] sm:$0x1] %vm1090, %v1174
      $region40: #{d2block_forward.2} parent=31 // pred_fallthru
        _
      %s1176 = smul.u32 26, %s16
      %p1177 = scmp.lt.s32.totalorder %s1176, 51
      %s1178 = scalar_select %p1177, %s1176, 51
      %s1179 = smul.addr %s1178, 4
      %s1180 = scalar_lea.vmem %s3, %s1179
      %p1181 = scmp.lt.s32.totalorder %s16, 1
      %s1182 = scalar_select %p1181, %s16, 1
      %s1183 = smul.addr %s1182, 2
      %s1184 = scalar_lea.vmem %s4, %s1183
      // Predicated region
      $region41: #{d2block_forward.2} parent=31 // pred_check
        %p1185 = pneg %p102
      $region42: #{d2block_forward.2} parent=31 // pred_check_branch
        %1187 = sbr.rel (%p1185) target = $region44
      $region43: #{d2block_forward.2} parent=31 // pred_region
        %s1188 = smul.u32 26, %s16
      $region44: #{d2block_forward.2} parent=31 // pred_fallthru
        _
      // Predicated region
      $region45: #{d2block_forward.2} parent=31 // pred_check
        %p1189 = pneg %p128
      $region46: #{d2block_forward.2} parent=31 // pred_check_branch
        %1191 = sbr.rel (%p1189) target = $region48
      $region47: #{d2block_forward.2} parent=31 // pred_region
        _
      $region48: #{d2block_forward.2} parent=31 // pred_fallthru
        _
    $region32: #{d2block_forward.2} parent=5 // pred_fallthru
      _
    %p1192 = scmp.le.s32.totalorder 2, %s11
    // Predicated region
    $region49: #{d2block_forward.2} parent=5 // pred_check
      %p1193 = pneg %p1192
    $region50: #{d2block_forward.2} parent=5 // pred_check_branch
      %1195 = sbr.rel (%p1193) target = $region52
    $region51: #{d2block_forward.2} parent=5 // pred_region
      %s1196 = ssub.s32 %s11, 2
      // Predicated region
      $region53: #{d2block_forward.2} parent=51 // pred_check
        %p1197 = pneg %p108
      $region54: #{d2block_forward.2} parent=51 // pred_check_branch
        %1199 = sbr.rel (%p1197) target = $region56
      $region55: #{d2block_forward.2} parent=51 // pred_region
        %s1200 = smul.u32 26, %s17
        %p1201 = scmp.lt.s32.totalorder %s1200, 51
        %s1202 = scalar_select %p1201, %s1200, 51
        %s1203 = smul.addr %s1202, 4
        %s1204 = scalar_lea.vmem %s3, %s1203
      $region56: #{d2block_forward.2} parent=51 // pred_fallthru
        _
      // Predicated region
      $region57: #{d2block_forward.2} parent=51 // pred_check
        %p1205 = pneg %p134
      $region58: #{d2block_forward.2} parent=51 // pred_check_branch
        %1207 = sbr.rel (%p1205) target = $region60
      $region59: #{d2block_forward.2} parent=51 // pred_region
        %p1208 = scmp.lt.s32.totalorder %s17, 1
        %s1209 = scalar_select %p1208, %s17, 1
        %s1210 = smul.addr %s1209, 2
        %s1211 = scalar_lea.vmem %s4, %s1210
      $region60: #{d2block_forward.2} parent=51 // pred_fallthru
        _
    $region52: #{d2block_forward.2} parent=5 // pred_fallthru
      _
  $region6: #{d2block_forward.2} parent=0 // loop_footer
    %s15 = sadd.s32 1, %s11
  $region7: #{d2block_forward.2} parent=0 // loop_footer_branch
    %10 = sbr.rel target = $region3
  $region8: #{d2block_forward.2} parent=0 // loop_exit
    _

</llo_original>
